<compile_context>
chip_gen: v6e
topology: v6e:2x2x1
jax: 0.10.0
libtpu: 0.0.40
codegen_flags: <defaults>
</compile_context>

<pallas_src>
import functools

import jax
import jax.numpy as jnp
from jax import lax
from jax.experimental import pallas as pl
from jax.experimental.pallas import tpu as pltpu

HEADS = 5
DIM = 64          # transformer dim (ChannelWiseTransformerBlock dim)
DIM_HEAD = 64
INNER = HEADS * DIM_HEAD        # 320
QKV = 3 * INNER                 # 960


def _ssmctb_kernel(slab_ref, xin_ref, wcat_ref, bsum_ref, wp_ref, posb_ref,
                   wqkvT_ref, woT_ref, bo_ref, out_ref, sse_ref, *, batch_tile):
    C = out_ref.shape[1]

    for bt in range(batch_tile):        # static unrolled loop over the batch tile
        # ---- fused shifted 1x1 convs (hot path) -----------------------------
        # (C, 4C) bf16  x  (4C, HW) bf16  ->  (C, HW) f32   (one MXU pass)
        y = jnp.dot(wcat_ref[...], slab_ref[bt],
                    preferred_element_type=jnp.float32)
        y = jnp.maximum(y + bsum_ref[...], 0.0)                 # + summed bias, ReLU

        # ---- ChannelWiseTransformerBlock (tiny; bf16 MXU operands) ----------
        # AdaptiveAvgPool2d(1): spatial sum (1/HW is folded into wp)
        pooled = jnp.sum(y, axis=1, keepdims=True)              # (C, 1)
        # Linear(1, DIM) + bias + positional embedding (bias folded into posb)
        t = (pooled * wp_ref[...] + posb_ref[...]).astype(jnp.bfloat16)   # (C, DIM)

        qkv = jnp.dot(t, wqkvT_ref[...],
                      preferred_element_type=jnp.float32)       # (C, 960) f32
        heads_out = []
        for h in range(HEADS):
            qh = qkv[:, h * DIM_HEAD:(h + 1) * DIM_HEAD].astype(jnp.bfloat16)
            kh = qkv[:, INNER + h * DIM_HEAD:
                        INNER + (h + 1) * DIM_HEAD].astype(jnp.bfloat16)
            vh = qkv[:, 2 * INNER + h * DIM_HEAD:
                        2 * INNER + (h + 1) * DIM_HEAD].astype(jnp.bfloat16)
            # 1/sqrt(dim_head) already folded into the q columns of wqkvT
            dots = lax.dot_general(qh, kh, (((1,), (1,)), ((), ())),
                                   preferred_element_type=jnp.float32)   # (C, C)
            dots = dots - jnp.max(dots, axis=-1, keepdims=True)
            p = jnp.exp(dots)
            attn = (p * pl.reciprocal(jnp.sum(p, axis=-1, keepdims=True),
                                      approx=True)).astype(jnp.bfloat16)
            heads_out.append(jnp.dot(attn, vh,
                                     preferred_element_type=jnp.float32))  # (C, d)
        # concat('b h n d -> b n (h d)') then ONE to_out matmul (C,320)x(320,64)
        o_cat = jnp.concatenate(heads_out, axis=1).astype(jnp.bfloat16)    # (C, 320)
        o64 = jnp.dot(o_cat, woT_ref[...],
                      preferred_element_type=jnp.float32) + bo_ref[...]    # (C, DIM)

        # woT / bo were pre-scaled by 1/DIM in the wrapper, so the row-sum is
        # the feature mean feeding the sigmoid gate.
        gate = jax.nn.sigmoid(jnp.sum(o64, axis=-1, keepdims=True))        # (C, 1)

        out = y * gate                                           # (C, HW) lane-dense
        out_ref[bt] = out

        # per-image SSE in f32; the mean over B*C*H*W is done in the wrapper
        diff = out - xin_ref[bt]
        sse_ref[bt] = jnp.sum(diff * diff, keepdims=True)        # (1, 1)


def ssmctb_forward(x_in, params, kernel_dim=1, dilation=1, batch_tile=None):
    """x_in: (B, C, H, W) float32 (NCHW).  Returns (out_nchw, mse_scalar)."""
    B, C, H, W = x_in.shape
    # TODO(synk): general kernel_dim > 1 (true k x k conv) path not implemented;
    # the module's default kernel_dim=1 (1x1 convs) is what this kernel covers.
    assert kernel_dim == 1, "only kernel_dim=1 (1x1 convs) is supported"
    pad = kernel_dim + dilation
    border = kernel_dim + 2 * dilation + 1
    HW = H * W

    # Batch tile: fewer, fatter grid steps; keep grid length >= 2 for v7x's two
    # TensorCores when B allows it.
    if batch_tile is None:
        batch_tile = 1 if B <= 2 else next(
            d for d in range(B // 2, 0, -1) if B % d == 0)
    assert B % batch_tile == 0
    grid = B // batch_tile

    # ---- wrapper-side window extraction: one (B, 4C, HW) bf16 slab ----------
    xp = jnp.pad(x_in, ((0, 0), (0, 0), (pad, pad), (pad, pad)))
    s1 = xp[:, :, 0:H,               0:W]
    s2 = xp[:, :, border:border + H, 0:W]
    s3 = xp[:, :, 0:H,               border:border + W]
    s4 = xp[:, :, border:border + H, border:border + W]
    slab = jnp.concatenate([s1, s2, s3, s4], axis=1) \
              .reshape(B, 4 * C, HW).astype(jnp.bfloat16)
    xin_c = x_in.reshape(B, C, HW)                  # free reshape (NCHW-major), f32 for MSE

    # fused conv weight (C, 4C): columns ordered [w1 | w2 | w3 | w4]
    wcat = jnp.concatenate([params['w1'], params['w2'],
                            params['w3'], params['w4']],
                           axis=1).astype(jnp.bfloat16)
    bsum = (params['b1'] + params['b2'] + params['b3']
            + params['b4']).reshape(C, 1).astype(jnp.float32)
    # 1/HW folded into the projection weight
    wp = (params['proj_w'].T * (1.0 / HW)).astype(jnp.float32)             # (1, DIM)
    posb = (params['pos'].reshape(C, DIM)
            + params['proj_b'].reshape(1, DIM)).astype(jnp.float32)        # (C, DIM)
    # 1/sqrt(dim_head) folded into the q columns; bf16 transformer weights
    qscale = jnp.concatenate([jnp.full((INNER,), DIM_HEAD ** -0.5, jnp.float32),
                              jnp.ones((2 * INNER,), jnp.float32)])
    wqkvT = (params['qkv_w'].T * qscale[None, :]).astype(jnp.bfloat16)     # (DIM, 960)
    # 1/DIM (the gate's feature mean) folded into to_out weight + bias
    woT = (params['out_w'].T * (1.0 / DIM)).astype(jnp.bfloat16)           # (320, DIM)
    bo = (params['out_b'] * (1.0 / DIM)).reshape(1, DIM).astype(jnp.float32)

    def const_spec(shape):
        return pl.BlockSpec(shape, lambda b, s=shape: (0,) * len(s))

    grid_spec = pltpu.PrefetchScalarGridSpec(
        num_scalar_prefetch=0,
        grid=(grid,),
        in_specs=[
            pl.BlockSpec((batch_tile, 4 * C, HW), lambda b: (b, 0, 0)),  # window slab
            pl.BlockSpec((batch_tile, C, HW), lambda b: (b, 0, 0)),      # x_in (C, HW)
            const_spec((C, 4 * C)),                                      # fused conv weight
            const_spec((C, 1)),                                          # summed conv bias
            const_spec((1, DIM)),                                        # projection weight / HW
            const_spec((C, DIM)),                                        # pos emb + proj bias
            const_spec((DIM, QKV)),                                      # qkv weight^T (scaled q)
            const_spec((INNER, DIM)),                                    # to_out weight^T / DIM
            const_spec((1, DIM)),                                        # to_out bias / DIM
        ],
        out_specs=[
            pl.BlockSpec((batch_tile, C, HW), lambda b: (b, 0, 0)),
            pl.BlockSpec((batch_tile, 1, 1), lambda b: (b, 0, 0)),
        ],
    )

    kernel = functools.partial(_ssmctb_kernel, batch_tile=batch_tile)
    out_c, sse = pl.pallas_call(
        kernel,
        out_shape=(jax.ShapeDtypeStruct((B, C, HW), jnp.float32),
                   jax.ShapeDtypeStruct((B, 1, 1), jnp.float32)),
        grid_spec=grid_spec,
        compiler_params=pltpu.CompilerParams(
            dimension_semantics=("parallel",),          # no cross-batch state
            # Re-derive for production C/H/W/batch_tile; this fits comfortably
            # inside v7x's 64 MiB physical / 32 MiB scoped-default VMEM.
            vmem_limit_bytes=32 * 1024 * 1024),
    )(slab, xin_c, wcat, bsum, wp, posb, wqkvT, woT, bo)

    out_nchw = out_c.reshape(B, C, H, W)                 # free reshape back to NCHW
    mse = jnp.sum(sse) / float(B * C * H * W)
    return out_nchw, mse


def init_params(key, C):
    ks = jax.random.split(key, 14)
    rn = lambda k, shape: 0.1 * jax.random.normal(k, shape, jnp.float32)
    return dict(
        w1=rn(ks[0], (C, C)), b1=rn(ks[1], (C,)),
        w2=rn(ks[2], (C, C)), b2=rn(ks[3], (C,)),
        w3=rn(ks[4], (C, C)), b3=rn(ks[5], (C,)),
        w4=rn(ks[6], (C, C)), b4=rn(ks[7], (C,)),
        proj_w=rn(ks[8], (DIM, 1)), proj_b=rn(ks[9], (DIM,)),
        pos=rn(ks[10], (1, C, DIM)),
        qkv_w=rn(ks[11], (QKV, DIM)),
        out_w=rn(ks[12], (DIM, INNER)), out_b=rn(ks[13], (DIM,)),
    )


def reference(x_in, p, kernel_dim=1, dilation=1):
    """Pure-JAX (f32) mirror of the PyTorch forward, for verification."""
    B, C, H, W = x_in.shape
    pad = kernel_dim + dilation
    border = kernel_dim + 2 * dilation + 1
    xp = jnp.pad(x_in, ((0, 0), (0, 0), (pad, pad), (pad, pad)))
    s1 = xp[:, :, :-border, :-border]
    s2 = xp[:, :, border:, :-border]
    s3 = xp[:, :, :-border, border:]
    s4 = xp[:, :, border:, border:]

    def conv(w, b, s):
        return jnp.einsum('oc,bchw->bohw', w, s,
                          precision=lax.Precision.HIGHEST) + b[None, :, None, None]

    y = jax.nn.relu(conv(p['w1'], p['b1'], s1) + conv(p['w2'], p['b2'], s2)
                    + conv(p['w3'], p['b3'], s3) + conv(p['w4'], p['b4'], s4))

    pooled = jnp.mean(y, axis=(2, 3))                                      # (B, C)
    t = pooled[:, :, None] * p['proj_w'][:, 0][None, None, :] \
        + p['proj_b'][None, None, :]                                       # (B, C, DIM)
    t = t + p['pos']
    qkv = jnp.einsum('bnd,ed->bne', t, p['qkv_w'],
                     precision=lax.Precision.HIGHEST)                      # (B, C, 960)
    q, k, v = jnp.split(qkv, 3, axis=-1)

    def heads(a):
        return jnp.transpose(a.reshape(B, C, HEADS, DIM_HEAD), (0, 2, 1, 3))

    q, k, v = heads(q), heads(k), heads(v)
    dots = jnp.einsum('bhid,bhjd->bhij', q, k,
                      precision=lax.Precision.HIGHEST) * (DIM_HEAD ** -0.5)
    attn = jax.nn.softmax(dots, axis=-1)
    o = jnp.einsum('bhij,bhjd->bhid', attn, v, precision=lax.Precision.HIGHEST)
    o = jnp.transpose(o, (0, 2, 1, 3)).reshape(B, C, INNER)
    o = jnp.einsum('bni,di->bnd', o, p['out_w'],
                   precision=lax.Precision.HIGHEST) + p['out_b']
    gate = jax.nn.sigmoid(jnp.mean(o, axis=-1))                            # (B, C)
    z = y * gate[:, :, None, None]
    mse = jnp.mean((z - x_in) ** 2)
    return z, mse


if __name__ == "__main__":
    B, C, H, W = 2, 4, 16, 16
    key = jax.random.PRNGKey(0)
    kp, kx = jax.random.split(key)
    params = init_params(kp, C)
    x_in = jax.random.normal(kx, (B, C, H, W), jnp.float32)

    out, mse = ssmctb_forward(x_in, params)
    out = jax.block_until_ready(out)
    mse = jax.block_until_ready(mse)

    out_ref, mse_ref = reference(x_in, params)
    assert out.shape == (B, C, H, W)
    assert jnp.all(jnp.isfinite(out)) and jnp.isfinite(mse)
    # bf16 conv slab / bf16 transformer-weight matmuls (f32 accumulate) plus an
    # approx softmax reciprocal -> relaxed tolerances vs the all-f32 reference.
    assert jnp.allclose(out, out_ref, rtol=1e-2, atol=1e-2), "output mismatch"
    assert jnp.allclose(mse, mse_ref, rtol=1e-2, atol=1e-3), "mse mismatch"

    print("KERNEL_OK")
</pallas_src>

<mosaic_0001>
module attributes {stable_mosaic.version = 11 : i64} {
  func.func @_ssmctb_kernel(%arg0: i32, %arg1: memref<1x16x256xbf16, #tpu.memory_space<vmem>>, %arg2: memref<1x4x256xf32, #tpu.memory_space<vmem>>, %arg3: memref<4x16xbf16, #tpu.memory_space<vmem>>, %arg4: memref<4x1xf32, #tpu.memory_space<vmem>>, %arg5: memref<1x64xf32, #tpu.memory_space<vmem>>, %arg6: memref<4x64xf32, #tpu.memory_space<vmem>>, %arg7: memref<64x960xbf16, #tpu.memory_space<vmem>>, %arg8: memref<320x64xbf16, #tpu.memory_space<vmem>>, %arg9: memref<1x64xf32, #tpu.memory_space<vmem>>, %arg10: memref<1x4x256xf32, #tpu.memory_space<vmem>>, %arg11: memref<1x1x1xf32, #tpu.memory_space<vmem>>) attributes {dimension_semantics = [#tpu.dimension_semantics<parallel>], iteration_bounds = array<i64: 2>, scalar_prefetch = 0 : i64, scratch_operands = 0 : i64, tpu.core_type = #tpu.core_type<tc>, window_params = [{transform_indices = @transform_0, window_bounds = array<i64: 1, 16, 256>}, {transform_indices = @transform_1, window_bounds = array<i64: 1, 4, 256>}, {pipeline_mode = #tpu.pipeline_mode<synchronous>, transform_indices = @transform_2, window_bounds = array<i64: 4, 16>}, {pipeline_mode = #tpu.pipeline_mode<synchronous>, transform_indices = @transform_3, window_bounds = array<i64: 4, 1>}, {pipeline_mode = #tpu.pipeline_mode<synchronous>, transform_indices = @transform_4, window_bounds = array<i64: 1, 64>}, {pipeline_mode = #tpu.pipeline_mode<synchronous>, transform_indices = @transform_5, window_bounds = array<i64: 4, 64>}, {pipeline_mode = #tpu.pipeline_mode<synchronous>, transform_indices = @transform_6, window_bounds = array<i64: 64, 960>}, {pipeline_mode = #tpu.pipeline_mode<synchronous>, transform_indices = @transform_7, window_bounds = array<i64: 320, 64>}, {pipeline_mode = #tpu.pipeline_mode<synchronous>, transform_indices = @transform_8, window_bounds = array<i64: 1, 64>}, {transform_indices = @transform_9, window_bounds = array<i64: 1, 4, 256>}, {transform_indices = @transform_10, window_bounds = array<i64: 1, 1, 1>}]} {
    %c0 = arith.constant 0 : index
    %c0_0 = arith.constant 0 : index
    %0 = vector.load %arg3[%c0, %c0_0] : memref<4x16xbf16, #tpu.memory_space<vmem>>, vector<4x16xbf16>
    %c0_1 = arith.constant 0 : index
    %c0_2 = arith.constant 0 : index
    %c0_3 = arith.constant 0 : index
    %1 = vector.load %arg1[%c0_1, %c0_2, %c0_3] : memref<1x16x256xbf16, #tpu.memory_space<vmem>>, vector<1x16x256xbf16>
    %2 = vector.shape_cast %1 : vector<1x16x256xbf16> to vector<16x256xbf16>
    %cst = arith.constant dense<0.000000e+00> : vector<4x256xf32>
    %3 = tpu.matmul %0, %2, %cst {dimension_numbers = #tpu.dot_dimension_numbers<[1], [0], [0], [1], [0, 0, 1, 1], [], []>} : vector<4x16xbf16>, vector<16x256xbf16>, vector<4x256xf32> -> vector<4x256xf32>
    %c0_4 = arith.constant 0 : index
    %c0_5 = arith.constant 0 : index
    %4 = vector.load %arg4[%c0_4, %c0_5] : memref<4x1xf32, #tpu.memory_space<vmem>>, vector<4x1xf32>
    %5 = vector.broadcast %4 : vector<4x1xf32> to vector<4x256xf32>
    %6 = arith.addf %3, %5 : vector<4x256xf32>
    %cst_6 = arith.constant 0.000000e+00 : f32
    %7 = vector.broadcast %cst_6 : f32 to vector<4x256xf32>
    %8 = arith.maximumf %6, %7 : vector<4x256xf32>
    %cst_7 = arith.constant dense<0.000000e+00> : vector<4xf32>
    %9 = vector.multi_reduction <add>, %8, %cst_7 [1] : vector<4x256xf32> to vector<4xf32>
    %10 = vector.shape_cast %9 : vector<4xf32> to vector<4x1xf32>
    %c0_8 = arith.constant 0 : index
    %c0_9 = arith.constant 0 : index
    %11 = vector.load %arg5[%c0_8, %c0_9] : memref<1x64xf32, #tpu.memory_space<vmem>>, vector<1x64xf32>
    %12 = vector.broadcast %10 : vector<4x1xf32> to vector<4x64xf32>
    %13 = vector.broadcast %11 : vector<1x64xf32> to vector<4x64xf32>
    %14 = arith.mulf %12, %13 : vector<4x64xf32>
    %c0_10 = arith.constant 0 : index
    %c0_11 = arith.constant 0 : index
    %15 = vector.load %arg6[%c0_10, %c0_11] : memref<4x64xf32, #tpu.memory_space<vmem>>, vector<4x64xf32>
    %16 = arith.addf %14, %15 : vector<4x64xf32>
    %17 = arith.truncf %16 : vector<4x64xf32> to vector<4x64xbf16>
    %c0_12 = arith.constant 0 : index
    %c0_13 = arith.constant 0 : index
    %18 = vector.load %arg7[%c0_12, %c0_13] : memref<64x960xbf16, #tpu.memory_space<vmem>>, vector<64x960xbf16>
    %cst_14 = arith.constant dense<0.000000e+00> : vector<4x960xf32>
    %19 = tpu.matmul %17, %18, %cst_14 {dimension_numbers = #tpu.dot_dimension_numbers<[1], [0], [0], [1], [0, 0, 1, 1], [], []>} : vector<4x64xbf16>, vector<64x960xbf16>, vector<4x960xf32> -> vector<4x960xf32>
    %20 = vector.extract_strided_slice %19 {offsets = [0, 0], sizes = [4, 64], strides = [1, 1]} : vector<4x960xf32> to vector<4x64xf32>
    %21 = arith.truncf %20 : vector<4x64xf32> to vector<4x64xbf16>
    %22 = vector.extract_strided_slice %19 {offsets = [0, 320], sizes = [4, 64], strides = [1, 1]} : vector<4x960xf32> to vector<4x64xf32>
    %23 = arith.truncf %22 : vector<4x64xf32> to vector<4x64xbf16>
    %24 = vector.extract_strided_slice %19 {offsets = [0, 640], sizes = [4, 64], strides = [1, 1]} : vector<4x960xf32> to vector<4x64xf32>
    %25 = arith.truncf %24 : vector<4x64xf32> to vector<4x64xbf16>
    %cst_15 = arith.constant dense<0.000000e+00> : vector<4x4xf32>
    %26 = tpu.matmul %21, %23, %cst_15 {dimension_numbers = #tpu.dot_dimension_numbers<[1], [1], [0], [0], [0, 0, 1, 0], [], []>} : vector<4x64xbf16>, vector<4x64xbf16>, vector<4x4xf32> -> vector<4x4xf32>
    %cst_16 = arith.constant dense<0xFF800000> : vector<4xf32>
    %27 = vector.multi_reduction <maximumf>, %26, %cst_16 [1] : vector<4x4xf32> to vector<4xf32>
    %28 = vector.shape_cast %27 : vector<4xf32> to vector<4x1xf32>
    %29 = vector.broadcast %28 : vector<4x1xf32> to vector<4x4xf32>
    %30 = arith.subf %26, %29 : vector<4x4xf32>
    %31 = math.exp %30 : vector<4x4xf32>
    %cst_17 = arith.constant dense<0.000000e+00> : vector<4xf32>
    %32 = vector.multi_reduction <add>, %31, %cst_17 [1] : vector<4x4xf32> to vector<4xf32>
    %33 = vector.shape_cast %32 : vector<4xf32> to vector<4x1xf32>
    %34 = tpu.reciprocal %33 {approx = true} : vector<4x1xf32> -> vector<4x1xf32>
    %35 = vector.broadcast %34 : vector<4x1xf32> to vector<4x4xf32>
    %36 = arith.mulf %31, %35 : vector<4x4xf32>
    %37 = arith.truncf %36 : vector<4x4xf32> to vector<4x4xbf16>
    %cst_18 = arith.constant dense<0.000000e+00> : vector<4x64xf32>
    %38 = tpu.matmul %37, %25, %cst_18 {dimension_numbers = #tpu.dot_dimension_numbers<[1], [0], [0], [1], [0, 0, 1, 1], [], []>} : vector<4x4xbf16>, vector<4x64xbf16>, vector<4x64xf32> -> vector<4x64xf32>
    %39 = vector.extract_strided_slice %19 {offsets = [0, 64], sizes = [4, 64], strides = [1, 1]} : vector<4x960xf32> to vector<4x64xf32>
    %40 = arith.truncf %39 : vector<4x64xf32> to vector<4x64xbf16>
    %41 = vector.extract_strided_slice %19 {offsets = [0, 384], sizes = [4, 64], strides = [1, 1]} : vector<4x960xf32> to vector<4x64xf32>
    %42 = arith.truncf %41 : vector<4x64xf32> to vector<4x64xbf16>
    %43 = vector.extract_strided_slice %19 {offsets = [0, 704], sizes = [4, 64], strides = [1, 1]} : vector<4x960xf32> to vector<4x64xf32>
    %44 = arith.truncf %43 : vector<4x64xf32> to vector<4x64xbf16>
    %cst_19 = arith.constant dense<0.000000e+00> : vector<4x4xf32>
    %45 = tpu.matmul %40, %42, %cst_19 {dimension_numbers = #tpu.dot_dimension_numbers<[1], [1], [0], [0], [0, 0, 1, 0], [], []>} : vector<4x64xbf16>, vector<4x64xbf16>, vector<4x4xf32> -> vector<4x4xf32>
    %cst_20 = arith.constant dense<0xFF800000> : vector<4xf32>
    %46 = vector.multi_reduction <maximumf>, %45, %cst_20 [1] : vector<4x4xf32> to vector<4xf32>
    %47 = vector.shape_cast %46 : vector<4xf32> to vector<4x1xf32>
    %48 = vector.broadcast %47 : vector<4x1xf32> to vector<4x4xf32>
    %49 = arith.subf %45, %48 : vector<4x4xf32>
    %50 = math.exp %49 : vector<4x4xf32>
    %cst_21 = arith.constant dense<0.000000e+00> : vector<4xf32>
    %51 = vector.multi_reduction <add>, %50, %cst_21 [1] : vector<4x4xf32> to vector<4xf32>
    %52 = vector.shape_cast %51 : vector<4xf32> to vector<4x1xf32>
    %53 = tpu.reciprocal %52 {approx = true} : vector<4x1xf32> -> vector<4x1xf32>
    %54 = vector.broadcast %53 : vector<4x1xf32> to vector<4x4xf32>
    %55 = arith.mulf %50, %54 : vector<4x4xf32>
    %56 = arith.truncf %55 : vector<4x4xf32> to vector<4x4xbf16>
    %cst_22 = arith.constant dense<0.000000e+00> : vector<4x64xf32>
    %57 = tpu.matmul %56, %44, %cst_22 {dimension_numbers = #tpu.dot_dimension_numbers<[1], [0], [0], [1], [0, 0, 1, 1], [], []>} : vector<4x4xbf16>, vector<4x64xbf16>, vector<4x64xf32> -> vector<4x64xf32>
    %58 = vector.extract_strided_slice %19 {offsets = [0, 128], sizes = [4, 64], strides = [1, 1]} : vector<4x960xf32> to vector<4x64xf32>
    %59 = arith.truncf %58 : vector<4x64xf32> to vector<4x64xbf16>
    %60 = vector.extract_strided_slice %19 {offsets = [0, 448], sizes = [4, 64], strides = [1, 1]} : vector<4x960xf32> to vector<4x64xf32>
    %61 = arith.truncf %60 : vector<4x64xf32> to vector<4x64xbf16>
    %62 = vector.extract_strided_slice %19 {offsets = [0, 768], sizes = [4, 64], strides = [1, 1]} : vector<4x960xf32> to vector<4x64xf32>
    %63 = arith.truncf %62 : vector<4x64xf32> to vector<4x64xbf16>
    %cst_23 = arith.constant dense<0.000000e+00> : vector<4x4xf32>
    %64 = tpu.matmul %59, %61, %cst_23 {dimension_numbers = #tpu.dot_dimension_numbers<[1], [1], [0], [0], [0, 0, 1, 0], [], []>} : vector<4x64xbf16>, vector<4x64xbf16>, vector<4x4xf32> -> vector<4x4xf32>
    %cst_24 = arith.constant dense<0xFF800000> : vector<4xf32>
    %65 = vector.multi_reduction <maximumf>, %64, %cst_24 [1] : vector<4x4xf32> to vector<4xf32>
    %66 = vector.shape_cast %65 : vector<4xf32> to vector<4x1xf32>
    %67 = vector.broadcast %66 : vector<4x1xf32> to vector<4x4xf32>
    %68 = arith.subf %64, %67 : vector<4x4xf32>
    %69 = math.exp %68 : vector<4x4xf32>
    %cst_25 = arith.constant dense<0.000000e+00> : vector<4xf32>
    %70 = vector.multi_reduction <add>, %69, %cst_25 [1] : vector<4x4xf32> to vector<4xf32>
    %71 = vector.shape_cast %70 : vector<4xf32> to vector<4x1xf32>
    %72 = tpu.reciprocal %71 {approx = true} : vector<4x1xf32> -> vector<4x1xf32>
    %73 = vector.broadcast %72 : vector<4x1xf32> to vector<4x4xf32>
    %74 = arith.mulf %69, %73 : vector<4x4xf32>
    %75 = arith.truncf %74 : vector<4x4xf32> to vector<4x4xbf16>
    %cst_26 = arith.constant dense<0.000000e+00> : vector<4x64xf32>
    %76 = tpu.matmul %75, %63, %cst_26 {dimension_numbers = #tpu.dot_dimension_numbers<[1], [0], [0], [1], [0, 0, 1, 1], [], []>} : vector<4x4xbf16>, vector<4x64xbf16>, vector<4x64xf32> -> vector<4x64xf32>
    %77 = vector.extract_strided_slice %19 {offsets = [0, 192], sizes = [4, 64], strides = [1, 1]} : vector<4x960xf32> to vector<4x64xf32>
    %78 = arith.truncf %77 : vector<4x64xf32> to vector<4x64xbf16>
    %79 = vector.extract_strided_slice %19 {offsets = [0, 512], sizes = [4, 64], strides = [1, 1]} : vector<4x960xf32> to vector<4x64xf32>
    %80 = arith.truncf %79 : vector<4x64xf32> to vector<4x64xbf16>
    %81 = vector.extract_strided_slice %19 {offsets = [0, 832], sizes = [4, 64], strides = [1, 1]} : vector<4x960xf32> to vector<4x64xf32>
    %82 = arith.truncf %81 : vector<4x64xf32> to vector<4x64xbf16>
    %cst_27 = arith.constant dense<0.000000e+00> : vector<4x4xf32>
    %83 = tpu.matmul %78, %80, %cst_27 {dimension_numbers = #tpu.dot_dimension_numbers<[1], [1], [0], [0], [0, 0, 1, 0], [], []>} : vector<4x64xbf16>, vector<4x64xbf16>, vector<4x4xf32> -> vector<4x4xf32>
    %cst_28 = arith.constant dense<0xFF800000> : vector<4xf32>
    %84 = vector.multi_reduction <maximumf>, %83, %cst_28 [1] : vector<4x4xf32> to vector<4xf32>
    %85 = vector.shape_cast %84 : vector<4xf32> to vector<4x1xf32>
    %86 = vector.broadcast %85 : vector<4x1xf32> to vector<4x4xf32>
    %87 = arith.subf %83, %86 : vector<4x4xf32>
    %88 = math.exp %87 : vector<4x4xf32>
    %cst_29 = arith.constant dense<0.000000e+00> : vector<4xf32>
    %89 = vector.multi_reduction <add>, %88, %cst_29 [1] : vector<4x4xf32> to vector<4xf32>
    %90 = vector.shape_cast %89 : vector<4xf32> to vector<4x1xf32>
    %91 = tpu.reciprocal %90 {approx = true} : vector<4x1xf32> -> vector<4x1xf32>
    %92 = vector.broadcast %91 : vector<4x1xf32> to vector<4x4xf32>
    %93 = arith.mulf %88, %92 : vector<4x4xf32>
    %94 = arith.truncf %93 : vector<4x4xf32> to vector<4x4xbf16>
    %cst_30 = arith.constant dense<0.000000e+00> : vector<4x64xf32>
    %95 = tpu.matmul %94, %82, %cst_30 {dimension_numbers = #tpu.dot_dimension_numbers<[1], [0], [0], [1], [0, 0, 1, 1], [], []>} : vector<4x4xbf16>, vector<4x64xbf16>, vector<4x64xf32> -> vector<4x64xf32>
    %96 = vector.extract_strided_slice %19 {offsets = [0, 256], sizes = [4, 64], strides = [1, 1]} : vector<4x960xf32> to vector<4x64xf32>
    %97 = arith.truncf %96 : vector<4x64xf32> to vector<4x64xbf16>
    %98 = vector.extract_strided_slice %19 {offsets = [0, 576], sizes = [4, 64], strides = [1, 1]} : vector<4x960xf32> to vector<4x64xf32>
    %99 = arith.truncf %98 : vector<4x64xf32> to vector<4x64xbf16>
    %100 = vector.extract_strided_slice %19 {offsets = [0, 896], sizes = [4, 64], strides = [1, 1]} : vector<4x960xf32> to vector<4x64xf32>
    %101 = arith.truncf %100 : vector<4x64xf32> to vector<4x64xbf16>
    %cst_31 = arith.constant dense<0.000000e+00> : vector<4x4xf32>
    %102 = tpu.matmul %97, %99, %cst_31 {dimension_numbers = #tpu.dot_dimension_numbers<[1], [1], [0], [0], [0, 0, 1, 0], [], []>} : vector<4x64xbf16>, vector<4x64xbf16>, vector<4x4xf32> -> vector<4x4xf32>
    %cst_32 = arith.constant dense<0xFF800000> : vector<4xf32>
    %103 = vector.multi_reduction <maximumf>, %102, %cst_32 [1] : vector<4x4xf32> to vector<4xf32>
    %104 = vector.shape_cast %103 : vector<4xf32> to vector<4x1xf32>
    %105 = vector.broadcast %104 : vector<4x1xf32> to vector<4x4xf32>
    %106 = arith.subf %102, %105 : vector<4x4xf32>
    %107 = math.exp %106 : vector<4x4xf32>
    %cst_33 = arith.constant dense<0.000000e+00> : vector<4xf32>
    %108 = vector.multi_reduction <add>, %107, %cst_33 [1] : vector<4x4xf32> to vector<4xf32>
    %109 = vector.shape_cast %108 : vector<4xf32> to vector<4x1xf32>
    %110 = tpu.reciprocal %109 {approx = true} : vector<4x1xf32> -> vector<4x1xf32>
    %111 = vector.broadcast %110 : vector<4x1xf32> to vector<4x4xf32>
    %112 = arith.mulf %107, %111 : vector<4x4xf32>
    %113 = arith.truncf %112 : vector<4x4xf32> to vector<4x4xbf16>
    %cst_34 = arith.constant dense<0.000000e+00> : vector<4x64xf32>
    %114 = tpu.matmul %113, %101, %cst_34 {dimension_numbers = #tpu.dot_dimension_numbers<[1], [0], [0], [1], [0, 0, 1, 1], [], []>} : vector<4x4xbf16>, vector<4x64xbf16>, vector<4x64xf32> -> vector<4x64xf32>
    %115 = tpu.concatenate %38, %57, %76, %95, %114 in 1 : vector<4x64xf32>, vector<4x64xf32>, vector<4x64xf32>, vector<4x64xf32>, vector<4x64xf32> -> vector<4x320xf32>
    %116 = arith.truncf %115 : vector<4x320xf32> to vector<4x320xbf16>
    %c0_35 = arith.constant 0 : index
    %c0_36 = arith.constant 0 : index
    %117 = vector.load %arg8[%c0_35, %c0_36] : memref<320x64xbf16, #tpu.memory_space<vmem>>, vector<320x64xbf16>
    %cst_37 = arith.constant dense<0.000000e+00> : vector<4x64xf32>
    %118 = tpu.matmul %116, %117, %cst_37 {dimension_numbers = #tpu.dot_dimension_numbers<[1], [0], [0], [1], [0, 0, 1, 1], [], []>} : vector<4x320xbf16>, vector<320x64xbf16>, vector<4x64xf32> -> vector<4x64xf32>
    %c0_38 = arith.constant 0 : index
    %c0_39 = arith.constant 0 : index
    %119 = vector.load %arg9[%c0_38, %c0_39] : memref<1x64xf32, #tpu.memory_space<vmem>>, vector<1x64xf32>
    %120 = vector.broadcast %119 : vector<1x64xf32> to vector<4x64xf32>
    %121 = arith.addf %118, %120 : vector<4x64xf32>
    %cst_40 = arith.constant dense<0.000000e+00> : vector<4xf32>
    %122 = vector.multi_reduction <add>, %121, %cst_40 [1] : vector<4x64xf32> to vector<4xf32>
    %123 = vector.shape_cast %122 : vector<4xf32> to vector<4x1xf32>
    %124 = arith.negf %123 : vector<4x1xf32>
    %125 = math.exp %124 : vector<4x1xf32>
    %cst_41 = arith.constant 1.000000e+00 : f32
    %126 = vector.broadcast %cst_41 : f32 to vector<4x1xf32>
    %127 = arith.addf %126, %125 : vector<4x1xf32>
    %128 = arith.divf %126, %127 : vector<4x1xf32>
    %129 = vector.broadcast %128 : vector<4x1xf32> to vector<4x256xf32>
    %130 = arith.mulf %8, %129 : vector<4x256xf32>
    %c0_42 = arith.constant 0 : index
    %c0_43 = arith.constant 0 : index
    %c0_44 = arith.constant 0 : index
    %131 = vector.load %arg10[%c0_42, %c0_43, %c0_44] : memref<1x4x256xf32, #tpu.memory_space<vmem>>, vector<1x4x256xf32>
    %132 = vector.shape_cast %131 : vector<1x4x256xf32> to vector<4x256xf32>
    %133 = vector.shape_cast %130 : vector<4x256xf32> to vector<1x4x256xf32>
    tpu.vector_store %arg10[%c0_42, %c0_43, %c0_44], %133 {strides = array<i32>} : memref<1x4x256xf32, #tpu.memory_space<vmem>>, vector<1x4x256xf32>,
    %c0_45 = arith.constant 0 : index
    %c0_46 = arith.constant 0 : index
    %c0_47 = arith.constant 0 : index
    %134 = vector.load %arg2[%c0_45, %c0_46, %c0_47] : memref<1x4x256xf32, #tpu.memory_space<vmem>>, vector<1x4x256xf32>
    %135 = vector.shape_cast %134 : vector<1x4x256xf32> to vector<4x256xf32>
    %136 = arith.subf %130, %135 : vector<4x256xf32>
    %137 = arith.mulf %136, %136 : vector<4x256xf32>
    %138 = vector.shape_cast %137 : vector<4x256xf32> to vector<1x4x256xf32>
    %cst_48 = arith.constant dense<0.000000e+00> : vector<1xf32>
    %139 = vector.multi_reduction <add>, %138, %cst_48 [1, 2] : vector<1x4x256xf32> to vector<1xf32>
    %140 = vector.shape_cast %139 : vector<1xf32> to vector<1x1x1xf32>
    %141 = vector.extract %140[0, 0, 0] : f32 from vector<1x1x1xf32>
    %142 = vector.broadcast %141 : f32 to vector<1x1xf32>
    %c0_49 = arith.constant 0 : index
    %c0_50 = arith.constant 0 : index
    %c0_51 = arith.constant 0 : index
    %143 = vector.load %arg11[%c0_49, %c0_50, %c0_51] : memref<1x1x1xf32, #tpu.memory_space<vmem>>, vector<1x1x1xf32>
    %144 = vector.shape_cast %143 : vector<1x1x1xf32> to vector<1x1xf32>
    %145 = vector.shape_cast %142 : vector<1x1xf32> to vector<1x1x1xf32>
    tpu.vector_store %arg11[%c0_49, %c0_50, %c0_51], %145 {strides = array<i32>} : memref<1x1x1xf32, #tpu.memory_space<vmem>>, vector<1x1x1xf32>,
    return
  }
  func.func @transform_0(%arg0: i32) -> (i32, i32, i32) {
    %c0_i32 = arith.constant 0 : i32
    %c0_i32_0 = arith.constant 0 : i32
    %c0_i32_1 = arith.constant 0 : i32
    return %arg0, %c0_i32, %c0_i32_0 : i32, i32, i32
  }
  func.func @transform_1(%arg0: i32) -> (i32, i32, i32) {
    %c0_i32 = arith.constant 0 : i32
    %c0_i32_0 = arith.constant 0 : i32
    %c0_i32_1 = arith.constant 0 : i32
    return %arg0, %c0_i32, %c0_i32_0 : i32, i32, i32
  }
  func.func @transform_2(%arg0: i32) -> (i32, i32) {
    %c0_i32 = arith.constant 0 : i32
    %c0_i32_0 = arith.constant 0 : i32
    %c0_i32_1 = arith.constant 0 : i32
    return %c0_i32, %c0_i32_0 : i32, i32
  }
  func.func @transform_3(%arg0: i32) -> (i32, i32) {
    %c0_i32 = arith.constant 0 : i32
    %c0_i32_0 = arith.constant 0 : i32
    %c0_i32_1 = arith.constant 0 : i32
    return %c0_i32, %c0_i32_0 : i32, i32
  }
  func.func @transform_4(%arg0: i32) -> (i32, i32) {
    %c0_i32 = arith.constant 0 : i32
    %c0_i32_0 = arith.constant 0 : i32
    %c0_i32_1 = arith.constant 0 : i32
    return %c0_i32, %c0_i32_0 : i32, i32
  }
  func.func @transform_5(%arg0: i32) -> (i32, i32) {
    %c0_i32 = arith.constant 0 : i32
    %c0_i32_0 = arith.constant 0 : i32
    %c0_i32_1 = arith.constant 0 : i32
    return %c0_i32, %c0_i32_0 : i32, i32
  }
  func.func @transform_6(%arg0: i32) -> (i32, i32) {
    %c0_i32 = arith.constant 0 : i32
    %c0_i32_0 = arith.constant 0 : i32
    %c0_i32_1 = arith.constant 0 : i32
    return %c0_i32, %c0_i32_0 : i32, i32
  }
  func.func @transform_7(%arg0: i32) -> (i32, i32) {
    %c0_i32 = arith.constant 0 : i32
    %c0_i32_0 = arith.constant 0 : i32
    %c0_i32_1 = arith.constant 0 : i32
    return %c0_i32, %c0_i32_0 : i32, i32
  }
  func.func @transform_8(%arg0: i32) -> (i32, i32) {
    %c0_i32 = arith.constant 0 : i32
    %c0_i32_0 = arith.constant 0 : i32
    %c0_i32_1 = arith.constant 0 : i32
    return %c0_i32, %c0_i32_0 : i32, i32
  }
  func.func @transform_9(%arg0: i32) -> (i32, i32, i32) {
    %c0_i32 = arith.constant 0 : i32
    %c0_i32_0 = arith.constant 0 : i32
    %c0_i32_1 = arith.constant 0 : i32
    return %arg0, %c0_i32, %c0_i32_0 : i32, i32, i32
  }
  func.func @transform_10(%arg0: i32) -> (i32, i32, i32) {
    %c0_i32 = arith.constant 0 : i32
    %c0_i32_0 = arith.constant 0 : i32
    %c0_i32_1 = arith.constant 0 : i32
    return %arg0, %c0_i32, %c0_i32_0 : i32, i32, i32
  }
}

</mosaic_0001>

<llo_original>
// kernel: tpu_custom_call.1
$region0: #{tpu_custom_call.1}
  #allocation0 [shape = 'u32[]', space=smem, size = 0x4, offset = 0x4, fixed_abs, tag = 'smem constant byte address 0x4 - core index']
  #allocation1 [shape = 'u32[144,128]{1,0:T(1,128)}', space=vmem, size = 0x12000, scoped, tag = 'internal scratch']
  %s0 = inlined_call_operand.hbm [shape: bf16[2,16,256], index: 0, kind: input, shape index: {}]
  %s1 = inlined_call_operand.hbm [shape: f32[2,4,256], index: 1, kind: input, shape index: {}]
  %s2 = inlined_call_operand.vmem [shape: bf16[4,16], index: 2, kind: input, shape index: {}]
  %s3 = inlined_call_operand.vmem [shape: f32[4,1], index: 3, kind: input, shape index: {}]
  %s4 = inlined_call_operand.vmem [shape: f32[1,64], index: 4, kind: input, shape index: {}]
  %s5 = inlined_call_operand.vmem [shape: f32[4,64], index: 5, kind: input, shape index: {}]
  %s6 = inlined_call_operand.vmem [shape: bf16[64,960], index: 6, kind: input, shape index: {}]
  %s7 = inlined_call_operand.vmem [shape: bf16[320,64], index: 7, kind: input, shape index: {}]
  %s8 = inlined_call_operand.vmem [shape: f32[1,64], index: 8, kind: input, shape index: {}]
  %s9 = inlined_call_operand.hbm [shape: f32[2,4,256], index: 9, kind: output, shape index: {0}]
  %s10 = inlined_call_operand.vmem [shape: f32[2,1,1], index: 10, kind: output, shape index: {1}]
  %11 = xla_tuple %s9, %s10
  %s12 = sld [smem:[#allocation0]]
  $region85: #{tpu_custom_call.1} parent=0
    _
  %s14 = ssub.s32 1, %s12
  %s15 = scalar_select 0, %s14, %s12
  $region1: #{tpu_custom_call.1} parent=0
    #allocation2 [shape = 'u8[16384]{0}', space=vmem, size = 0x4000, scoped, tag = 'input window, operand 0']
    #allocation3 [shape = 's32[2]{0}', space=sflag, size = 0x8, scoped, tag = 'scoped memory for tpu_custom_call.1']
    #allocation4 [shape = 's32[2]{0}', space=sflag, size = 0x8, scoped, tag = 'scoped memory for tpu_custom_call.1']
    #allocation5 [shape = 'u8[8192]{0}', space=vmem, size = 0x2000, scoped, tag = 'input window, operand 1']
    #allocation6 [shape = 's32[2]{0}', space=sflag, size = 0x8, scoped, tag = 'scoped memory for tpu_custom_call.1']
    #allocation7 [shape = 'u8[8192]{0}', space=vmem, size = 0x2000, scoped, tag = 'output window, operand 0']
    %16 = vsyncpa [#allocation3], 0
    %s17 = scalar_lea.sflag [#allocation3], 1
    %18 = vsyncpa %s17, 0
    %19 = vsyncpa [#allocation6], 0
    %s20 = scalar_lea.sflag [#allocation6], 1
    %21 = vsyncpa %s20, 0
    %22 = vsyncpa [#allocation4], 0
    %s23 = scalar_lea.sflag [#allocation4], 1
    %24 = vsyncpa %s23, 0
    loop: start=0, step=1, limit=4
    $region2: #{tpu_custom_call.1} parent=1 // loop_pre_header
      _
    $region3: #{tpu_custom_call.1} parent=1 // loop_header
      %s26 = sphi 0, %s30
      %p27 = scmp.ge.s32.totalorder %s26, 4
      %s36 = sphi 0, %s38
      %s39 = sphi 0, %s36
      %s40 = sphi 0, %s39
      %s56 = sphi 0, %s40
      %s62 = sphi 0, %s64
      %s65 = sphi 0, %s62
      %s66 = sphi 0, %s65
      %s82 = sphi 0, %s66
      %s86 = sphi 0, %s86
      %s88 = sphi 0, %s86
      %s89 = sphi 0, %s88
      %s103 = sphi 0, %s89
      %s107 = sphi 0, %s107
      %s109 = sphi 0, %s107
      %s110 = sphi 0, %s109
      %s124 = sphi 0, %s110
      %s128 = sphi 0, %s128
      %s130 = sphi 0, %s128
      %s131 = sphi 0, %s130
      %s145 = sphi 0, %s131
      %s149 = sphi 0, %s149
      %s151 = sphi 0, %s149
      %s152 = sphi 0, %s151
      %s166 = sphi 0, %s152
      %s170 = sphi 0, %s170
      %s172 = sphi 0, %s170
      %s173 = sphi 0, %s172
      %s187 = sphi 0, %s173
      %s191 = sphi 0, %s191
      %s193 = sphi 0, %s191
      %s194 = sphi 0, %s193
      %s208 = sphi 0, %s194
      %s212 = sphi 0, %s212
      %s214 = sphi 0, %s212
      %s215 = sphi 0, %s214
      %s229 = sphi 0, %s215
      %s235 = sphi 0, %s237
      %s238 = sphi 0, %s235
      %s239 = sphi 0, %s238
      %s255 = sphi 0, %s239
      %s261 = sphi 0, %s263
      %s264 = sphi 0, %s261
      %s265 = sphi 0, %s264
      %s281 = sphi 0, %s265
    $region4: #{tpu_custom_call.1} parent=1 // loop_header_branch
      %29 = sbr.rel (%p27) target = $region8
    $region5: #{tpu_custom_call.1} parent=1 // loop_body
      %s31 = ssub.s32 %s26, 1
      %s32 = ssub.s32 %s26, 2
      %s33 = sadd.s32 %s26, 1
      %s34 = ssub.s32 %s26, %s33
      %p35 = scmp.eq.s32.totalorder %s34, 0
      %s37 = sadd.s32 %s36, 1
      %s38 = scalar_select %p35, %s36, %s37
      %p41 = pneg %p35
      %p42 = scmp.eq.s32.totalorder %s26, 1
      %p43 = por %p41, %p42
      %p44 = scmp.ne.s32.totalorder %s36, %s39
      %p45 = scmp.eq.s32.totalorder %s26, 0
      %p46 = por %p44, %p45
      %p47 = scmp.ne.s32.totalorder %s36, %s39
      %p48 = scmp.eq.s32.totalorder %s31, 1
      %p49 = por %p47, %p48
      %p50 = scmp.ne.s32.totalorder %s39, %s40
      %p51 = scmp.eq.s32.totalorder %s31, 0
      %p52 = por %p50, %p51
      %p53 = scmp.ne.s32.totalorder %s39, %s40
      %p54 = scmp.eq.s32.totalorder %s32, 1
      %p55 = por %p53, %p54
      %p57 = scmp.ne.s32.totalorder %s40, %s56
      %p58 = scmp.eq.s32.totalorder %s32, 0
      %p59 = por %p57, %p58
      %s60 = ssub.s32 %s26, %s33
      %p61 = scmp.eq.s32.totalorder %s60, 0
      %s63 = sadd.s32 %s62, 1
      %s64 = scalar_select %p61, %s62, %s63
      %p67 = pneg %p61
      %p68 = scmp.eq.s32.totalorder %s26, 1
      %p69 = por %p67, %p68
      %p70 = scmp.ne.s32.totalorder %s62, %s65
      %p71 = scmp.eq.s32.totalorder %s26, 0
      %p72 = por %p70, %p71
      %p73 = scmp.ne.s32.totalorder %s62, %s65
      %p74 = scmp.eq.s32.totalorder %s31, 1
      %p75 = por %p73, %p74
      %p76 = scmp.ne.s32.totalorder %s65, %s66
      %p77 = scmp.eq.s32.totalorder %s31, 0
      %p78 = por %p76, %p77
      %p79 = scmp.ne.s32.totalorder %s65, %s66
      %p80 = scmp.eq.s32.totalorder %s32, 1
      %p81 = por %p79, %p80
      %p83 = scmp.ne.s32.totalorder %s66, %s82
      %p84 = scmp.eq.s32.totalorder %s32, 0
      %p85 = por %p83, %p84
      %s87 = sadd.s32 %s86, 1
      %p90 = scmp.eq.s32.totalorder %s26, 1
      %p91 = scmp.ne.s32.totalorder %s86, %s88
      %p92 = scmp.eq.s32.totalorder %s26, 0
      %p93 = por %p91, %p92
      %p94 = scmp.ne.s32.totalorder %s86, %s88
      %p95 = scmp.eq.s32.totalorder %s31, 1
      %p96 = por %p94, %p95
      %p97 = scmp.ne.s32.totalorder %s88, %s89
      %p98 = scmp.eq.s32.totalorder %s31, 0
      %p99 = por %p97, %p98
      %p100 = scmp.ne.s32.totalorder %s88, %s89
      %p101 = scmp.eq.s32.totalorder %s32, 1
      %p102 = por %p100, %p101
      %p104 = scmp.ne.s32.totalorder %s89, %s103
      %p105 = scmp.eq.s32.totalorder %s32, 0
      %p106 = por %p104, %p105
      %s108 = sadd.s32 %s107, 1
      %p111 = scmp.eq.s32.totalorder %s26, 1
      %p112 = scmp.ne.s32.totalorder %s107, %s109
      %p113 = scmp.eq.s32.totalorder %s26, 0
      %p114 = por %p112, %p113
      %p115 = scmp.ne.s32.totalorder %s107, %s109
      %p116 = scmp.eq.s32.totalorder %s31, 1
      %p117 = por %p115, %p116
      %p118 = scmp.ne.s32.totalorder %s109, %s110
      %p119 = scmp.eq.s32.totalorder %s31, 0
      %p120 = por %p118, %p119
      %p121 = scmp.ne.s32.totalorder %s109, %s110
      %p122 = scmp.eq.s32.totalorder %s32, 1
      %p123 = por %p121, %p122
      %p125 = scmp.ne.s32.totalorder %s110, %s124
      %p126 = scmp.eq.s32.totalorder %s32, 0
      %p127 = por %p125, %p126
      %s129 = sadd.s32 %s128, 1
      %p132 = scmp.eq.s32.totalorder %s26, 1
      %p133 = scmp.ne.s32.totalorder %s128, %s130
      %p134 = scmp.eq.s32.totalorder %s26, 0
      %p135 = por %p133, %p134
      %p136 = scmp.ne.s32.totalorder %s128, %s130
      %p137 = scmp.eq.s32.totalorder %s31, 1
      %p138 = por %p136, %p137
      %p139 = scmp.ne.s32.totalorder %s130, %s131
      %p140 = scmp.eq.s32.totalorder %s31, 0
      %p141 = por %p139, %p140
      %p142 = scmp.ne.s32.totalorder %s130, %s131
      %p143 = scmp.eq.s32.totalorder %s32, 1
      %p144 = por %p142, %p143
      %p146 = scmp.ne.s32.totalorder %s131, %s145
      %p147 = scmp.eq.s32.totalorder %s32, 0
      %p148 = por %p146, %p147
      %s150 = sadd.s32 %s149, 1
      %p153 = scmp.eq.s32.totalorder %s26, 1
      %p154 = scmp.ne.s32.totalorder %s149, %s151
      %p155 = scmp.eq.s32.totalorder %s26, 0
      %p156 = por %p154, %p155
      %p157 = scmp.ne.s32.totalorder %s149, %s151
      %p158 = scmp.eq.s32.totalorder %s31, 1
      %p159 = por %p157, %p158
      %p160 = scmp.ne.s32.totalorder %s151, %s152
      %p161 = scmp.eq.s32.totalorder %s31, 0
      %p162 = por %p160, %p161
      %p163 = scmp.ne.s32.totalorder %s151, %s152
      %p164 = scmp.eq.s32.totalorder %s32, 1
      %p165 = por %p163, %p164
      %p167 = scmp.ne.s32.totalorder %s152, %s166
      %p168 = scmp.eq.s32.totalorder %s32, 0
      %p169 = por %p167, %p168
      %s171 = sadd.s32 %s170, 1
      %p174 = scmp.eq.s32.totalorder %s26, 1
      %p175 = scmp.ne.s32.totalorder %s170, %s172
      %p176 = scmp.eq.s32.totalorder %s26, 0
      %p177 = por %p175, %p176
      %p178 = scmp.ne.s32.totalorder %s170, %s172
      %p179 = scmp.eq.s32.totalorder %s31, 1
      %p180 = por %p178, %p179
      %p181 = scmp.ne.s32.totalorder %s172, %s173
      %p182 = scmp.eq.s32.totalorder %s31, 0
      %p183 = por %p181, %p182
      %p184 = scmp.ne.s32.totalorder %s172, %s173
      %p185 = scmp.eq.s32.totalorder %s32, 1
      %p186 = por %p184, %p185
      %p188 = scmp.ne.s32.totalorder %s173, %s187
      %p189 = scmp.eq.s32.totalorder %s32, 0
      %p190 = por %p188, %p189
      %s192 = sadd.s32 %s191, 1
      %p195 = scmp.eq.s32.totalorder %s26, 1
      %p196 = scmp.ne.s32.totalorder %s191, %s193
      %p197 = scmp.eq.s32.totalorder %s26, 0
      %p198 = por %p196, %p197
      %p199 = scmp.ne.s32.totalorder %s191, %s193
      %p200 = scmp.eq.s32.totalorder %s31, 1
      %p201 = por %p199, %p200
      %p202 = scmp.ne.s32.totalorder %s193, %s194
      %p203 = scmp.eq.s32.totalorder %s31, 0
      %p204 = por %p202, %p203
      %p205 = scmp.ne.s32.totalorder %s193, %s194
      %p206 = scmp.eq.s32.totalorder %s32, 1
      %p207 = por %p205, %p206
      %p209 = scmp.ne.s32.totalorder %s194, %s208
      %p210 = scmp.eq.s32.totalorder %s32, 0
      %p211 = por %p209, %p210
      %s213 = sadd.s32 %s212, 1
      %p216 = scmp.eq.s32.totalorder %s26, 1
      %p217 = scmp.ne.s32.totalorder %s212, %s214
      %p218 = scmp.eq.s32.totalorder %s26, 0
      %p219 = por %p217, %p218
      %p220 = scmp.ne.s32.totalorder %s212, %s214
      %p221 = scmp.eq.s32.totalorder %s31, 1
      %p222 = por %p220, %p221
      %p223 = scmp.ne.s32.totalorder %s214, %s215
      %p224 = scmp.eq.s32.totalorder %s31, 0
      %p225 = por %p223, %p224
      %p226 = scmp.ne.s32.totalorder %s214, %s215
      %p227 = scmp.eq.s32.totalorder %s32, 1
      %p228 = por %p226, %p227
      %p230 = scmp.ne.s32.totalorder %s215, %s229
      %p231 = scmp.eq.s32.totalorder %s32, 0
      %p232 = por %p230, %p231
      %s233 = ssub.s32 %s26, %s33
      %p234 = scmp.eq.s32.totalorder %s233, 0
      %s236 = sadd.s32 %s235, 1
      %s237 = scalar_select %p234, %s235, %s236
      %p240 = pneg %p234
      %p241 = scmp.eq.s32.totalorder %s26, 1
      %p242 = por %p240, %p241
      %p243 = scmp.ne.s32.totalorder %s235, %s238
      %p244 = scmp.eq.s32.totalorder %s26, 0
      %p245 = por %p243, %p244
      %p246 = scmp.ne.s32.totalorder %s235, %s238
      %p247 = scmp.eq.s32.totalorder %s31, 1
      %p248 = por %p246, %p247
      %p249 = scmp.ne.s32.totalorder %s238, %s239
      %p250 = scmp.eq.s32.totalorder %s31, 0
      %p251 = por %p249, %p250
      %p252 = scmp.ne.s32.totalorder %s238, %s239
      %p253 = scmp.eq.s32.totalorder %s32, 1
      %p254 = por %p252, %p253
      %p256 = scmp.ne.s32.totalorder %s239, %s255
      %p257 = scmp.eq.s32.totalorder %s32, 0
      %p258 = por %p256, %p257
      %s259 = ssub.s32 %s26, %s33
      %p260 = scmp.eq.s32.totalorder %s259, 0
      %s262 = sadd.s32 %s261, 1
      %s263 = scalar_select %p260, %s261, %s262
      %p266 = pneg %p260
      %p267 = scmp.eq.s32.totalorder %s26, 1
      %p268 = por %p266, %p267
      %p269 = scmp.ne.s32.totalorder %s261, %s264
      %p270 = scmp.eq.s32.totalorder %s26, 0
      %p271 = por %p269, %p270
      %p272 = scmp.ne.s32.totalorder %s261, %s264
      %p273 = scmp.eq.s32.totalorder %s31, 1
      %p274 = por %p272, %p273
      %p275 = scmp.ne.s32.totalorder %s264, %s265
      %p276 = scmp.eq.s32.totalorder %s31, 0
      %p277 = por %p275, %p276
      %p278 = scmp.ne.s32.totalorder %s264, %s265
      %p279 = scmp.eq.s32.totalorder %s32, 1
      %p280 = por %p278, %p279
      %p282 = scmp.ne.s32.totalorder %s265, %s281
      %p283 = scmp.eq.s32.totalorder %s32, 0
      %p284 = por %p282, %p283
      %p285 = scmp.le.s32.totalorder 1, %s26
      %p286 = scmp.lt.s32.totalorder %s26, 3
      %p287 = pnand %p285, %p286
      %p288 = pneg %p287
      // Predicated region
      $region9: #{tpu_custom_call.1} parent=5 // pred_check
        _
      $region10: #{tpu_custom_call.1} parent=5 // pred_check_branch
        %290 = sbr.rel (%p287) target = $region12
      $region11: #{tpu_custom_call.1} parent=5 // pred_region
        %s291 = ssub.s32 %s26, 1
        // Predicated region
        $region13: #{tpu_custom_call.1} parent=11 // pred_check
          %p292 = pneg %p99
        $region14: #{tpu_custom_call.1} parent=11 // pred_check_branch
          %294 = sbr.rel (%p292) target = $region16
        $region15: #{tpu_custom_call.1} parent=11 // pred_region
          _
        $region16: #{tpu_custom_call.1} parent=11 // pred_fallthru
          _
        // Predicated region
        $region17: #{tpu_custom_call.1} parent=11 // pred_check
          %p295 = pneg %p120
        $region18: #{tpu_custom_call.1} parent=11 // pred_check_branch
          %297 = sbr.rel (%p295) target = $region20
        $region19: #{tpu_custom_call.1} parent=11 // pred_region
          _
        $region20: #{tpu_custom_call.1} parent=11 // pred_fallthru
          _
        // Predicated region
        $region21: #{tpu_custom_call.1} parent=11 // pred_check
          %p298 = pneg %p141
        $region22: #{tpu_custom_call.1} parent=11 // pred_check_branch
          %300 = sbr.rel (%p298) target = $region24
        $region23: #{tpu_custom_call.1} parent=11 // pred_region
          _
        $region24: #{tpu_custom_call.1} parent=11 // pred_fallthru
          _
        // Predicated region
        $region25: #{tpu_custom_call.1} parent=11 // pred_check
          %p301 = pneg %p162
        $region26: #{tpu_custom_call.1} parent=11 // pred_check_branch
          %303 = sbr.rel (%p301) target = $region28
        $region27: #{tpu_custom_call.1} parent=11 // pred_region
          _
        $region28: #{tpu_custom_call.1} parent=11 // pred_fallthru
          _
        // Predicated region
        $region29: #{tpu_custom_call.1} parent=11 // pred_check
          %p304 = pneg %p183
        $region30: #{tpu_custom_call.1} parent=11 // pred_check_branch
          %306 = sbr.rel (%p304) target = $region32
        $region31: #{tpu_custom_call.1} parent=11 // pred_region
          _
        $region32: #{tpu_custom_call.1} parent=11 // pred_fallthru
          _
        // Predicated region
        $region33: #{tpu_custom_call.1} parent=11 // pred_check
          %p307 = pneg %p204
        $region34: #{tpu_custom_call.1} parent=11 // pred_check_branch
          %309 = sbr.rel (%p307) target = $region36
        $region35: #{tpu_custom_call.1} parent=11 // pred_region
          _
        $region36: #{tpu_custom_call.1} parent=11 // pred_fallthru
          _
        // Predicated region
        $region37: #{tpu_custom_call.1} parent=11 // pred_check
          %p310 = pneg %p225
        $region38: #{tpu_custom_call.1} parent=11 // pred_check_branch
          %312 = sbr.rel (%p310) target = $region40
        $region39: #{tpu_custom_call.1} parent=11 // pred_region
          _
        $region40: #{tpu_custom_call.1} parent=11 // pred_fallthru
          _
      $region12: #{tpu_custom_call.1} parent=5 // pred_fallthru
        _
      %p313 = scmp.lt.s32.totalorder %s26, 2
      // Predicated region
      $region41: #{tpu_custom_call.1} parent=5 // pred_check
        %p314 = pneg %p313
      $region42: #{tpu_custom_call.1} parent=5 // pred_check_branch
        %316 = sbr.rel (%p314) target = $region44
      $region43: #{tpu_custom_call.1} parent=5 // pred_region
        // Predicated region
        $region45: #{tpu_custom_call.1} parent=43 // pred_check
          %p317 = pneg %p46
        $region46: #{tpu_custom_call.1} parent=43 // pred_check_branch
          %319 = sbr.rel (%p317) target = $region48
        $region47: #{tpu_custom_call.1} parent=43 // pred_region
          %s320 = sand.u32 %s36, 1
          %s321 = scalar_lea.sflag [#allocation3], %s320
          %s322 = sand.u32 %s36, 1
          %s323 = smul.addr %s322, 16
          %s324 = scalar_lea.vmem [#allocation2], %s323
          %s326 = ssub.s32 256, 256
          %327 = vsyncadd %s321, %s326
          %s328 = smul.addr %s26, 4
          %s329 = smul.addr %s328, 64
          %s330 = scalar_lea.hbm %s0, %s329
          %s331 = sshll.u32 %s324, 4
          %s332 = int_to_ptr.vmem [resolvable:$true] %s331
          %337 = dma.hbm_to_vmem [thread:$0]  %s330, 256, %s332, %s321, 128, 128, 8
        $region48: #{tpu_custom_call.1} parent=43 // pred_fallthru
          _
        // Predicated region
        $region49: #{tpu_custom_call.1} parent=43 // pred_check
          %p338 = pneg %p72
        $region50: #{tpu_custom_call.1} parent=43 // pred_check_branch
          %340 = sbr.rel (%p338) target = $region52
        $region51: #{tpu_custom_call.1} parent=43 // pred_region
          %s341 = sand.u32 %s62, 1
          %s342 = scalar_lea.sflag [#allocation6], %s341
          %s343 = sand.u32 %s62, 1
          %s344 = smul.addr %s343, 8
          %s345 = scalar_lea.vmem [#allocation5], %s344
          %s347 = ssub.s32 128, 128
          %348 = vsyncadd %s342, %s347
          %s349 = smul.addr %s26, 2
          %s350 = smul.addr %s349, 64
          %s351 = scalar_lea.hbm %s1, %s350
          %s353 = sshll.u32 %s345, 4
          %s354 = int_to_ptr.vmem [resolvable:$true] %s353
          %356 = dma.hbm_to_vmem [thread:$0]  %s351, 128, %s354, %s342
        $region52: #{tpu_custom_call.1} parent=43 // pred_fallthru
          _
      $region44: #{tpu_custom_call.1} parent=5 // pred_fallthru
        _
      %p357 = scmp.le.s32.totalorder 1, %s26
      %p358 = scmp.lt.s32.totalorder %s26, 3
      %p359 = pnand %p357, %p358
      %p360 = pneg %p359
      // Predicated region
      $region53: #{tpu_custom_call.1} parent=5 // pred_check
        _
      $region54: #{tpu_custom_call.1} parent=5 // pred_check_branch
        %362 = sbr.rel (%p359) target = $region56
      $region55: #{tpu_custom_call.1} parent=5 // pred_region
        %s363 = ssub.s32 %s26, 1
        %s364 = sand.u32 %s39, 1
        %s365 = scalar_lea.sflag [#allocation3], %s364
        %s366 = sand.u32 %s39, 1
        %s367 = smul.addr %s366, 16
        %s368 = scalar_lea.vmem [#allocation2], %s367
        // Predicated region
        $region57: #{tpu_custom_call.1} parent=55 // pred_check
          %p369 = pneg %p52
        $region58: #{tpu_custom_call.1} parent=55 // pred_check_branch
          %371 = sbr.rel (%p369) target = $region60
        $region59: #{tpu_custom_call.1} parent=55 // pred_region
          %372 = dma.done %s365, 256
        $region60: #{tpu_custom_call.1} parent=55 // pred_fallthru
          _
        %s373 = sand.u32 %s65, 1
        %s374 = scalar_lea.sflag [#allocation6], %s373
        %s375 = sand.u32 %s65, 1
        %s376 = smul.addr %s375, 8
        %s377 = scalar_lea.vmem [#allocation5], %s376
        // Predicated region
        $region61: #{tpu_custom_call.1} parent=55 // pred_check
          %p378 = pneg %p78
        $region62: #{tpu_custom_call.1} parent=55 // pred_check_branch
          %380 = sbr.rel (%p378) target = $region64
        $region63: #{tpu_custom_call.1} parent=55 // pred_region
          %381 = dma.done %s374, 128
        $region64: #{tpu_custom_call.1} parent=55 // pred_fallthru
          _
        %s382 = sand.u32 %s39, 1
        %s383 = scalar_lea.sflag [#allocation3], %s382
        %s384 = sand.u32 %s39, 1
        %s385 = smul.addr %s384, 16
        %s386 = scalar_lea.vmem [#allocation2], %s385
        %p387 = pneg %p52
        %p388 = pneg %p49
        %s389 = sand.u32 %s65, 1
        %s390 = scalar_lea.sflag [#allocation6], %s389
        %s391 = sand.u32 %s65, 1
        %s392 = smul.addr %s391, 8
        %s393 = scalar_lea.vmem [#allocation5], %s392
        %p394 = pneg %p78
        %p395 = pneg %p75
        %p396 = pneg %p99
        %p397 = pneg %p96
        %p398 = pneg %p120
        %p399 = pneg %p117
        %p400 = pneg %p141
        %p401 = pneg %p138
        %p402 = pneg %p162
        %p403 = pneg %p159
        %p404 = pneg %p183
        %p405 = pneg %p180
        %p406 = pneg %p204
        %p407 = pneg %p201
        %p408 = pneg %p225
        %p409 = pneg %p222
        %p410 = pneg %p251
        %p411 = pneg %p248
        %s412 = sand.u32 %s238, 1
        %s413 = scalar_lea.sflag [#allocation4], %s412
        %s414 = sand.u32 %s238, 1
        %s415 = smul.addr %s414, 8
        %s416 = scalar_lea.vmem [#allocation7], %s415
        %p417 = pneg %p277
        %p418 = pneg %p274
        %p419 = scmp.lt.s32.totalorder %s31, 1
        %s420 = scalar_select %p419, %s31, 1
        %s421 = scalar_lea.vmem %s10, %s420
        %p422 = scmp.lt.s32.totalorder %s31, 1
        %s423 = scalar_select %p422, %s31, 1
        %s424 = scalar_lea.vmem %s10, %s423
        %v426 = vld [vmem:[%s2] sm:$0x3]
        %v427 = vld [vmem:[%s368] sm:$0xff]
        %v428 = vld [vmem:[%s368 + $0x8] sm:$0xff]
        %v429 = vld [vmem:[%s3] sm:$0xf]
        %431 = vset.pattern.permute.xlu0 0
        %432 = vperm.xlu0 %431, %v429
        %v433 = vpop.permute.xlu0 %432
        %v437 = vunpack.c.l.b16 %v427
        %v438 = vunpack.c.h.b16 %v427
        %v439 = vunpack.c.l.b16 %v428
        %v440 = vunpack.c.h.b16 %v428
        %v441 = vpack.c.b16 %v439, %v437
        %v442 = vpack.c.b16 %v440, %v438
        %vm445 = vcmask 130048
        %v447 = vsel %vm445, %v426, 0
        %449 = vmatprep.subr.bf16.mxu0 0
        %450 = vmatpush1.bf16.msra.mxu0 0
        %451 = vmatprep.subr.bf16.mxu0 0
        %452 = vmatpush1.bf16.msra.mxu0 0
        %453 = vmatprep.subr.bf16.mxu0 0
        %454 = vmatpush1.bf16.msra.mxu0 0
        %455 = vmatprep.subr.bf16.mxu0 0
        %456 = vmatpush1.bf16.msra.mxu0 0
        %457 = vmatprep.subr.bf16.mxu0 0
        %458 = vmatpush1.bf16.msra.mxu0 0
        %459 = vmatprep.subr.bf16.mxu0 0
        %460 = vmatpush1.bf16.msra.mxu0 0
        %461 = vmatprep.subr.bf16.mxu0 0
        %462 = vmatpush1.bf16.msra.mxu0 0
        %463 = vmatprep.subr.bf16.mxu0 %v442
        %464 = vmatpush1.bf16.msra.mxu0 %v441
        %465 = vmatprep.subr.bf16.mxu0 0
        %466 = vmatpush2.bf16.msra.mxu0 0
        %467 = vmatprep.subr.bf16.mxu0 0
        %468 = vmatpush2.bf16.msra.mxu0 0
        %469 = vmatprep.subr.bf16.mxu0 0
        %470 = vmatpush2.bf16.msra.mxu0 0
        %471 = vmatprep.subr.bf16.mxu0 0
        %472 = vmatpush2.bf16.msra.mxu0 0
        %473 = vmatprep.subr.bf16.mxu0 0
        %474 = vmatpush2.bf16.msra.mxu0 0
        %475 = vmatprep.subr.bf16.mxu0 0
        %476 = vmatpush2.bf16.msra.mxu0 0
        %477 = vmatprep.subr.bf16.mxu0 0
        %478 = vmatpush2.bf16.msra.mxu0 0
        %479 = vmatprep.subr.bf16.mxu0 0
        %480 = vmatpush2.bf16.msra.mxu0 0
        %481 = vmatprep.mubr.bf16.mxu0 0
        %482 = vmatmul.mubr.bf16.gmra.mxu0 %v447
        %v483 = vpop.f32.mrf.mxu0
        %v484 = vadd.f32 %v433, %v483
        %v485 = vpop.f32.mrf.mxu0
        %v486 = vadd.f32 %v433, %v485
        %v487 = vpop.f32.mrf.mxu0
        %v488 = vpop.f32.mrf.mxu0
        %489 = vdwg.mxu0
        %v490 = vmax.f32 %v484, 0.0
        %v491 = vmax.f32 %v486, 0.0
        %vm492 = vcmask 1043456
        %v493 = vsel %vm492, %v490, 0.0
        %v494 = vsel %vm492, %v491, 0.0
        %v495 = vadd.f32 %v493, %v494
        %496 = vadd.xlane.f32.xlu0 %v495
        %v497 = vpop.xlane.xlu0 %496
        %v498 = vld [vmem:[%s4] sm:$0x1]
        %v500 = vlaneseq
        %v501 = vshrl.u32 %v500, 7
        %v502 = vsub.s32 0, %v501
        %v503 = vrot.slane %v498, %v502
        %v505 = vmul.f32 %v497, %v503
        %v506 = vld [vmem:[%s5] sm:$0xf]
        %v507 = vadd.f32 %v505, %v506
        %v508 = vpack.c.bf16 %v507, %v507
        %v509 = vld [vmem:[%s6] sm:$0xff]
        %v510 = vld [vmem:[%s6 + $0x8] sm:$0xff]
        %v511 = vld [vmem:[%s6 + $0x10] sm:$0xff]
        %v512 = vld [vmem:[%s6 + $0x18] sm:$0xff]
        %v513 = vld [vmem:[%s6 + $0x20] sm:$0xff]
        %v514 = vld [vmem:[%s6 + $0x28] sm:$0xff]
        %v515 = vld [vmem:[%s6 + $0x30] sm:$0xff]
        %v516 = vld [vmem:[%s6 + $0x38] sm:$0xff]
        %v517 = vld [vmem:[%s6 + $0x40] sm:$0xff]
        %v518 = vld [vmem:[%s6 + $0x48] sm:$0xff]
        %v519 = vld [vmem:[%s6 + $0x50] sm:$0xff]
        %v520 = vld [vmem:[%s6 + $0x58] sm:$0xff]
        %v521 = vld [vmem:[%s6 + $0x60] sm:$0xff]
        %v522 = vld [vmem:[%s6 + $0x68] sm:$0xff]
        %v523 = vld [vmem:[%s6 + $0x70] sm:$0xff]
        %v524 = vld [vmem:[%s6 + $0x78] sm:$0xff]
        %v525 = vld [vmem:[%s6 + $0x80] sm:$0xff]
        %v526 = vld [vmem:[%s6 + $0x88] sm:$0xff]
        %v527 = vld [vmem:[%s6 + $0x90] sm:$0xff]
        %v528 = vld [vmem:[%s6 + $0x98] sm:$0xff]
        %v529 = vld [vmem:[%s6 + $0xa0] sm:$0xff]
        %v530 = vld [vmem:[%s6 + $0xa8] sm:$0xff]
        %v531 = vld [vmem:[%s6 + $0xb0] sm:$0xff]
        %v532 = vld [vmem:[%s6 + $0xb8] sm:$0xff]
        %v533 = vld [vmem:[%s6 + $0xc0] sm:$0xff]
        %v534 = vld [vmem:[%s6 + $0xc8] sm:$0xff]
        %v535 = vld [vmem:[%s6 + $0xd0] sm:$0xff]
        %v536 = vld [vmem:[%s6 + $0xd8] sm:$0xff]
        %v537 = vld [vmem:[%s6 + $0xe0] sm:$0xff]
        %v538 = vld [vmem:[%s6 + $0xe8] sm:$0xff]
        %v539 = vld [vmem:[%s6 + $0xf0] sm:$0xff]
        %v540 = vld [vmem:[%s6 + $0xf8] sm:$0xff]
        %v573 = vunpack.c.l.b16 %v509
        %v574 = vunpack.c.h.b16 %v509
        %v575 = vunpack.c.l.b16 %v510
        %v576 = vunpack.c.h.b16 %v510
        %v577 = vunpack.c.l.b16 %v511
        %v578 = vunpack.c.h.b16 %v511
        %v579 = vunpack.c.l.b16 %v512
        %v580 = vunpack.c.h.b16 %v512
        %v581 = vunpack.c.l.b16 %v513
        %v582 = vunpack.c.h.b16 %v513
        %v583 = vunpack.c.l.b16 %v514
        %v584 = vunpack.c.h.b16 %v514
        %v585 = vunpack.c.l.b16 %v515
        %v586 = vunpack.c.h.b16 %v515
        %v587 = vunpack.c.l.b16 %v516
        %v588 = vunpack.c.h.b16 %v516
        %v589 = vunpack.c.l.b16 %v517
        %v590 = vunpack.c.h.b16 %v517
        %v591 = vunpack.c.l.b16 %v518
        %v592 = vunpack.c.h.b16 %v518
        %v593 = vunpack.c.l.b16 %v519
        %v594 = vunpack.c.h.b16 %v519
        %v595 = vunpack.c.l.b16 %v520
        %v596 = vunpack.c.h.b16 %v520
        %v597 = vunpack.c.l.b16 %v521
        %v598 = vunpack.c.h.b16 %v521
        %v599 = vunpack.c.l.b16 %v522
        %v600 = vunpack.c.h.b16 %v522
        %v601 = vunpack.c.l.b16 %v523
        %v602 = vunpack.c.h.b16 %v523
        %v603 = vunpack.c.l.b16 %v524
        %v604 = vunpack.c.h.b16 %v524
        %v605 = vunpack.c.l.b16 %v525
        %v606 = vunpack.c.h.b16 %v525
        %v607 = vunpack.c.l.b16 %v526
        %v608 = vunpack.c.h.b16 %v526
        %v609 = vunpack.c.l.b16 %v527
        %v610 = vunpack.c.h.b16 %v527
        %v611 = vunpack.c.l.b16 %v528
        %v612 = vunpack.c.h.b16 %v528
        %v613 = vunpack.c.l.b16 %v529
        %v614 = vunpack.c.h.b16 %v529
        %v615 = vunpack.c.l.b16 %v530
        %v616 = vunpack.c.h.b16 %v530
        %v617 = vunpack.c.l.b16 %v531
        %v618 = vunpack.c.h.b16 %v531
        %v619 = vunpack.c.l.b16 %v532
        %v620 = vunpack.c.h.b16 %v532
        %v621 = vunpack.c.l.b16 %v533
        %v622 = vunpack.c.h.b16 %v533
        %v623 = vunpack.c.l.b16 %v534
        %v624 = vunpack.c.h.b16 %v534
        %v625 = vunpack.c.l.b16 %v535
        %v626 = vunpack.c.h.b16 %v535
        %v627 = vunpack.c.l.b16 %v536
        %v628 = vunpack.c.h.b16 %v536
        %v629 = vunpack.c.l.b16 %v537
        %v630 = vunpack.c.h.b16 %v537
        %v631 = vunpack.c.l.b16 %v538
        %v632 = vunpack.c.h.b16 %v538
        %v633 = vunpack.c.l.b16 %v539
        %v634 = vunpack.c.h.b16 %v539
        %v635 = vunpack.c.l.b16 %v540
        %v636 = vunpack.c.h.b16 %v540
        %v637 = vpack.c.b16 %v581, %v573
        %v638 = vpack.c.b16 %v582, %v574
        %v639 = vpack.c.b16 %v583, %v575
        %v640 = vpack.c.b16 %v584, %v576
        %v641 = vpack.c.b16 %v585, %v577
        %v642 = vpack.c.b16 %v586, %v578
        %v643 = vpack.c.b16 %v587, %v579
        %v644 = vpack.c.b16 %v588, %v580
        %v645 = vpack.c.b16 %v597, %v589
        %v646 = vpack.c.b16 %v598, %v590
        %v647 = vpack.c.b16 %v599, %v591
        %v648 = vpack.c.b16 %v600, %v592
        %v649 = vpack.c.b16 %v601, %v593
        %v650 = vpack.c.b16 %v602, %v594
        %v651 = vpack.c.b16 %v603, %v595
        %v652 = vpack.c.b16 %v604, %v596
        %v653 = vpack.c.b16 %v613, %v605
        %v654 = vpack.c.b16 %v614, %v606
        %v655 = vpack.c.b16 %v615, %v607
        %v656 = vpack.c.b16 %v616, %v608
        %v657 = vpack.c.b16 %v617, %v609
        %v658 = vpack.c.b16 %v618, %v610
        %v659 = vpack.c.b16 %v619, %v611
        %v660 = vpack.c.b16 %v620, %v612
        %v661 = vpack.c.b16 %v629, %v621
        %v662 = vpack.c.b16 %v630, %v622
        %v663 = vpack.c.b16 %v631, %v623
        %v664 = vpack.c.b16 %v632, %v624
        %v665 = vpack.c.b16 %v633, %v625
        %v666 = vpack.c.b16 %v634, %v626
        %v667 = vpack.c.b16 %v635, %v627
        %v668 = vpack.c.b16 %v636, %v628
        %vm701 = vcmask 523264
        %v703 = vsel %vm701, %v508, 0
        %705 = vmatprep.subr.bf16.mxu0 0
        %706 = vmatpush1.bf16.msra.mxu0 0
        %707 = vmatprep.subr.bf16.mxu0 0
        %708 = vmatpush1.bf16.msra.mxu0 0
        %709 = vmatprep.subr.bf16.mxu0 0
        %710 = vmatpush1.bf16.msra.mxu0 0
        %711 = vmatprep.subr.bf16.mxu0 0
        %712 = vmatpush1.bf16.msra.mxu0 0
        %713 = vmatprep.subr.bf16.mxu0 %v662
        %714 = vmatpush1.bf16.msra.mxu0 %v661
        %715 = vmatprep.subr.bf16.mxu0 %v654
        %716 = vmatpush1.bf16.msra.mxu0 %v653
        %717 = vmatprep.subr.bf16.mxu0 %v646
        %718 = vmatpush1.bf16.msra.mxu0 %v645
        %719 = vmatprep.subr.bf16.mxu0 %v638
        %720 = vmatpush1.bf16.msra.mxu0 %v637
        %721 = vmatprep.subr.bf16.mxu0 0
        %722 = vmatpush2.bf16.msra.mxu0 0
        %723 = vmatprep.subr.bf16.mxu0 0
        %724 = vmatpush2.bf16.msra.mxu0 0
        %725 = vmatprep.subr.bf16.mxu0 0
        %726 = vmatpush2.bf16.msra.mxu0 0
        %727 = vmatprep.subr.bf16.mxu0 0
        %728 = vmatpush2.bf16.msra.mxu0 0
        %729 = vmatprep.subr.bf16.mxu0 0
        %730 = vmatpush2.bf16.msra.mxu0 0
        %731 = vmatprep.subr.bf16.mxu0 0
        %732 = vmatpush2.bf16.msra.mxu0 0
        %733 = vmatprep.subr.bf16.mxu0 0
        %734 = vmatpush2.bf16.msra.mxu0 0
        %735 = vmatprep.subr.bf16.mxu0 0
        %736 = vmatpush2.bf16.msra.mxu0 0
        %737 = vmatprep.mubr.bf16.mxu0 0
        %738 = vmatmul.mubr.bf16.gmra.mxu0 %v703
        %v739 = vpop.f32.mrf.mxu0
        %v740 = vadd.f32 0.0, %v739
        %v741 = vpop.f32.mrf.mxu0
        %v742 = vadd.f32 0.0, %v741
        %v743 = vpop.f32.mrf.mxu0
        %v744 = vpop.f32.mrf.mxu0
        %745 = vdwg.mxu0
        %746 = vmatprep.subr.bf16.mxu0 0
        %747 = vmatpush1.bf16.msra.mxu0 0
        %748 = vmatprep.subr.bf16.mxu0 0
        %749 = vmatpush1.bf16.msra.mxu0 0
        %750 = vmatprep.subr.bf16.mxu0 0
        %751 = vmatpush1.bf16.msra.mxu0 0
        %752 = vmatprep.subr.bf16.mxu0 0
        %753 = vmatpush1.bf16.msra.mxu0 0
        %754 = vmatprep.subr.bf16.mxu0 %v664
        %755 = vmatpush1.bf16.msra.mxu0 %v663
        %756 = vmatprep.subr.bf16.mxu0 %v656
        %757 = vmatpush1.bf16.msra.mxu0 %v655
        %758 = vmatprep.subr.bf16.mxu0 %v648
        %759 = vmatpush1.bf16.msra.mxu0 %v647
        %760 = vmatprep.subr.bf16.mxu0 %v640
        %761 = vmatpush1.bf16.msra.mxu0 %v639
        %762 = vmatprep.subr.bf16.mxu0 0
        %763 = vmatpush2.bf16.msra.mxu0 0
        %764 = vmatprep.subr.bf16.mxu0 0
        %765 = vmatpush2.bf16.msra.mxu0 0
        %766 = vmatprep.subr.bf16.mxu0 0
        %767 = vmatpush2.bf16.msra.mxu0 0
        %768 = vmatprep.subr.bf16.mxu0 0
        %769 = vmatpush2.bf16.msra.mxu0 0
        %770 = vmatprep.subr.bf16.mxu0 0
        %771 = vmatpush2.bf16.msra.mxu0 0
        %772 = vmatprep.subr.bf16.mxu0 0
        %773 = vmatpush2.bf16.msra.mxu0 0
        %774 = vmatprep.subr.bf16.mxu0 0
        %775 = vmatpush2.bf16.msra.mxu0 0
        %776 = vmatprep.subr.bf16.mxu0 0
        %777 = vmatpush2.bf16.msra.mxu0 0
        %778 = vmatprep.mubr.bf16.mxu0 0
        %779 = vmatmul.mubr.bf16.gmra.mxu0 %v703
        %v780 = vpop.f32.mrf.mxu0
        %v781 = vadd.f32 0.0, %v780
        %v782 = vpop.f32.mrf.mxu0
        %v783 = vadd.f32 0.0, %v782
        %v784 = vpop.f32.mrf.mxu0
        %v785 = vpop.f32.mrf.mxu0
        %786 = vdwg.mxu0
        %787 = vmatprep.subr.bf16.mxu0 0
        %788 = vmatpush1.bf16.msra.mxu0 0
        %789 = vmatprep.subr.bf16.mxu0 0
        %790 = vmatpush1.bf16.msra.mxu0 0
        %791 = vmatprep.subr.bf16.mxu0 0
        %792 = vmatpush1.bf16.msra.mxu0 0
        %793 = vmatprep.subr.bf16.mxu0 0
        %794 = vmatpush1.bf16.msra.mxu0 0
        %795 = vmatprep.subr.bf16.mxu0 %v666
        %796 = vmatpush1.bf16.msra.mxu0 %v665
        %797 = vmatprep.subr.bf16.mxu0 %v658
        %798 = vmatpush1.bf16.msra.mxu0 %v657
        %799 = vmatprep.subr.bf16.mxu0 %v650
        %800 = vmatpush1.bf16.msra.mxu0 %v649
        %801 = vmatprep.subr.bf16.mxu0 %v642
        %802 = vmatpush1.bf16.msra.mxu0 %v641
        %803 = vmatprep.subr.bf16.mxu0 0
        %804 = vmatpush2.bf16.msra.mxu0 0
        %805 = vmatprep.subr.bf16.mxu0 0
        %806 = vmatpush2.bf16.msra.mxu0 0
        %807 = vmatprep.subr.bf16.mxu0 0
        %808 = vmatpush2.bf16.msra.mxu0 0
        %809 = vmatprep.subr.bf16.mxu0 0
        %810 = vmatpush2.bf16.msra.mxu0 0
        %811 = vmatprep.subr.bf16.mxu0 0
        %812 = vmatpush2.bf16.msra.mxu0 0
        %813 = vmatprep.subr.bf16.mxu0 0
        %814 = vmatpush2.bf16.msra.mxu0 0
        %815 = vmatprep.subr.bf16.mxu0 0
        %816 = vmatpush2.bf16.msra.mxu0 0
        %817 = vmatprep.subr.bf16.mxu0 0
        %818 = vmatpush2.bf16.msra.mxu0 0
        %819 = vmatprep.mubr.bf16.mxu0 0
        %820 = vmatmul.mubr.bf16.gmra.mxu0 %v703
        %v821 = vpop.f32.mrf.mxu0
        %v822 = vadd.f32 0.0, %v821
        %v823 = vpop.f32.mrf.mxu0
        %v824 = vadd.f32 0.0, %v823
        %v825 = vpop.f32.mrf.mxu0
        %v826 = vpop.f32.mrf.mxu0
        %827 = vdwg.mxu0
        %828 = vmatprep.subr.bf16.mxu0 0
        %829 = vmatpush1.bf16.msra.mxu0 0
        %830 = vmatprep.subr.bf16.mxu0 0
        %831 = vmatpush1.bf16.msra.mxu0 0
        %832 = vmatprep.subr.bf16.mxu0 0
        %833 = vmatpush1.bf16.msra.mxu0 0
        %834 = vmatprep.subr.bf16.mxu0 0
        %835 = vmatpush1.bf16.msra.mxu0 0
        %836 = vmatprep.subr.bf16.mxu0 %v668
        %837 = vmatpush1.bf16.msra.mxu0 %v667
        %838 = vmatprep.subr.bf16.mxu0 %v660
        %839 = vmatpush1.bf16.msra.mxu0 %v659
        %840 = vmatprep.subr.bf16.mxu0 %v652
        %841 = vmatpush1.bf16.msra.mxu0 %v651
        %842 = vmatprep.subr.bf16.mxu0 %v644
        %843 = vmatpush1.bf16.msra.mxu0 %v643
        %844 = vmatprep.subr.bf16.mxu0 0
        %845 = vmatpush2.bf16.msra.mxu0 0
        %846 = vmatprep.subr.bf16.mxu0 0
        %847 = vmatpush2.bf16.msra.mxu0 0
        %848 = vmatprep.subr.bf16.mxu0 0
        %849 = vmatpush2.bf16.msra.mxu0 0
        %850 = vmatprep.subr.bf16.mxu0 0
        %851 = vmatpush2.bf16.msra.mxu0 0
        %852 = vmatprep.subr.bf16.mxu0 0
        %853 = vmatpush2.bf16.msra.mxu0 0
        %854 = vmatprep.subr.bf16.mxu0 0
        %855 = vmatpush2.bf16.msra.mxu0 0
        %856 = vmatprep.subr.bf16.mxu0 0
        %857 = vmatpush2.bf16.msra.mxu0 0
        %858 = vmatprep.subr.bf16.mxu0 0
        %859 = vmatpush2.bf16.msra.mxu0 0
        %860 = vmatprep.mubr.bf16.mxu0 0
        %861 = vmatmul.mubr.bf16.gmra.mxu0 %v703
        %v862 = vpop.f32.mrf.mxu0
        %v863 = vadd.f32 0.0, %v862
        %v864 = vpop.f32.mrf.mxu0
        %v865 = vadd.f32 0.0, %v864
        %v866 = vpop.f32.mrf.mxu0
        %v867 = vpop.f32.mrf.mxu0
        %868 = vdwg.mxu0
        %v869 = vpack.c.bf16 %v740, %v740
        %v870 = vpack.c.bf16 %v781, %v781
        %v871 = vpack.c.bf16 %v824, %v824
        %873 = vrot.lane.b32.xlu0 %v870, 64
        %v874 = vpop.permute.xlu0 %873
        %v876 = vsel %vm701, %v869, 0
        %v879 = vsel %vm701, %v874, 0
        %881 = vmatprep.subr.bf16.mxu0 0
        %882 = vmatpush1.bf16.xpose.msra.mxu0 0
        %883 = vmatprep.subr.bf16.mxu0 0
        %884 = vmatpush1.bf16.xpose.msra.mxu0 0
        %885 = vmatprep.subr.bf16.mxu0 0
        %886 = vmatpush1.bf16.xpose.msra.mxu0 0
        %887 = vmatprep.subr.bf16.mxu0 0
        %888 = vmatpush1.bf16.xpose.msra.mxu0 0
        %889 = vmatprep.subr.bf16.mxu0 0
        %890 = vmatpush1.bf16.xpose.msra.mxu0 0
        %891 = vmatprep.subr.bf16.mxu0 0
        %892 = vmatpush1.bf16.xpose.msra.mxu0 0
        %893 = vmatprep.subr.bf16.mxu0 0
        %894 = vmatpush1.bf16.xpose.msra.mxu0 0
        %895 = vmatprep.subr.bf16.mxu0 0
        %896 = vmatpush1.bf16.xpose.msra.mxu0 %v879
        %897 = vmatprep.subr.bf16.mxu0 0
        %898 = vmatpush2.bf16.xpose.msra.mxu0 0
        %899 = vmatprep.subr.bf16.mxu0 0
        %900 = vmatpush2.bf16.xpose.msra.mxu0 0
        %901 = vmatprep.subr.bf16.mxu0 0
        %902 = vmatpush2.bf16.xpose.msra.mxu0 0
        %903 = vmatprep.subr.bf16.mxu0 0
        %904 = vmatpush2.bf16.xpose.msra.mxu0 0
        %905 = vmatprep.subr.bf16.mxu0 0
        %906 = vmatpush2.bf16.xpose.msra.mxu0 0
        %907 = vmatprep.subr.bf16.mxu0 0
        %908 = vmatpush2.bf16.xpose.msra.mxu0 0
        %909 = vmatprep.subr.bf16.mxu0 0
        %910 = vmatpush2.bf16.xpose.msra.mxu0 0
        %911 = vmatprep.subr.bf16.mxu0 0
        %912 = vmatpush2.bf16.xpose.msra.mxu0 0
        %913 = vmatprep.mubr.bf16.mxu0 0
        %914 = vmatmul.mubr.bf16.gmra.mxu0 %v876
        %v915 = vpop.f32.mrf.mxu0
        %v916 = vadd.f32 0.0, %v915
        %v917 = vpop.f32.mrf.mxu0
        %v918 = vpop.f32.mrf.mxu0
        %v919 = vpop.f32.mrf.mxu0
        %920 = vdwg.mxu0
        %vm921 = vcmask 27648
        %v922 = vsel %vm921, %v916, -inf
        %923 = vmax.xlane.f32.xlu0 %v922
        %v924 = vpop.xlane.xlu0 %923
        %v925 = vsub.f32 %v916, %v924
        %v926 = vmul.f32 %v925, 1.442695
        %v927 = vpow.pop %v926
        %v928 = vsel %vm921, %v927, 0.0
        %929 = vadd.xlane.f32.xlu0 %v928
        %v930 = vpop.xlane.xlu0 %929
        %v931 = vrcp.pop %v930
        %v932 = vmul.f32 %v927, %v931
        %v933 = vpack.c.bf16 %v932, %v932
        %vm934 = vcmask 31744
        %v936 = vsel %vm934, %v933, 0
        %vm938 = vcmask 1041408
        %v940 = vsel %vm938, %v871, 0
        %942 = vmatprep.subr.bf16.mxu0 0
        %943 = vmatpush1.bf16.msra.mxu0 0
        %944 = vmatprep.subr.bf16.mxu0 0
        %945 = vmatpush1.bf16.msra.mxu0 0
        %946 = vmatprep.subr.bf16.mxu0 0
        %947 = vmatpush1.bf16.msra.mxu0 0
        %948 = vmatprep.subr.bf16.mxu0 0
        %949 = vmatpush1.bf16.msra.mxu0 0
        %950 = vmatprep.subr.bf16.mxu0 0
        %951 = vmatpush1.bf16.msra.mxu0 0
        %952 = vmatprep.subr.bf16.mxu0 0
        %953 = vmatpush1.bf16.msra.mxu0 0
        %954 = vmatprep.subr.bf16.mxu0 0
        %955 = vmatpush1.bf16.msra.mxu0 0
        %956 = vmatprep.subr.bf16.mxu0 0
        %957 = vmatpush1.bf16.msra.mxu0 %v940
        %958 = vmatprep.subr.bf16.mxu0 0
        %959 = vmatpush2.bf16.msra.mxu0 0
        %960 = vmatprep.subr.bf16.mxu0 0
        %961 = vmatpush2.bf16.msra.mxu0 0
        %962 = vmatprep.subr.bf16.mxu0 0
        %963 = vmatpush2.bf16.msra.mxu0 0
        %964 = vmatprep.subr.bf16.mxu0 0
        %965 = vmatpush2.bf16.msra.mxu0 0
        %966 = vmatprep.subr.bf16.mxu0 0
        %967 = vmatpush2.bf16.msra.mxu0 0
        %968 = vmatprep.subr.bf16.mxu0 0
        %969 = vmatpush2.bf16.msra.mxu0 0
        %970 = vmatprep.subr.bf16.mxu0 0
        %971 = vmatpush2.bf16.msra.mxu0 0
        %972 = vmatprep.subr.bf16.mxu0 0
        %973 = vmatpush2.bf16.msra.mxu0 0
        %974 = vmatprep.mubr.bf16.mxu0 0
        %975 = vmatmul.mubr.bf16.gmra.mxu0 %v936
        %v976 = vpop.f32.mrf.mxu0
        %v977 = vadd.f32 0.0, %v976
        %v978 = vpop.f32.mrf.mxu0
        %v979 = vpop.f32.mrf.mxu0
        %v980 = vpop.f32.mrf.mxu0
        %981 = vdwg.mxu0
        %v982 = vpack.c.bf16 %v783, %v783
        %984 = vrot.lane.b32.xlu0 %v869, 64
        %v985 = vpop.permute.xlu0 %984
        %v987 = vsel %vm701, %v985, 0
        %v990 = vsel %vm701, %v982, 0
        %992 = vmatprep.subr.bf16.mxu0 0
        %993 = vmatpush1.bf16.xpose.msra.mxu0 0
        %994 = vmatprep.subr.bf16.mxu0 0
        %995 = vmatpush1.bf16.xpose.msra.mxu0 0
        %996 = vmatprep.subr.bf16.mxu0 0
        %997 = vmatpush1.bf16.xpose.msra.mxu0 0
        %998 = vmatprep.subr.bf16.mxu0 0
        %999 = vmatpush1.bf16.xpose.msra.mxu0 0
        %1000 = vmatprep.subr.bf16.mxu0 0
        %1001 = vmatpush1.bf16.xpose.msra.mxu0 0
        %1002 = vmatprep.subr.bf16.mxu0 0
        %1003 = vmatpush1.bf16.xpose.msra.mxu0 0
        %1004 = vmatprep.subr.bf16.mxu0 0
        %1005 = vmatpush1.bf16.xpose.msra.mxu0 0
        %1006 = vmatprep.subr.bf16.mxu0 0
        %1007 = vmatpush1.bf16.xpose.msra.mxu0 %v990
        %1008 = vmatprep.subr.bf16.mxu0 0
        %1009 = vmatpush2.bf16.xpose.msra.mxu0 0
        %1010 = vmatprep.subr.bf16.mxu0 0
        %1011 = vmatpush2.bf16.xpose.msra.mxu0 0
        %1012 = vmatprep.subr.bf16.mxu0 0
        %1013 = vmatpush2.bf16.xpose.msra.mxu0 0
        %1014 = vmatprep.subr.bf16.mxu0 0
        %1015 = vmatpush2.bf16.xpose.msra.mxu0 0
        %1016 = vmatprep.subr.bf16.mxu0 0
        %1017 = vmatpush2.bf16.xpose.msra.mxu0 0
        %1018 = vmatprep.subr.bf16.mxu0 0
        %1019 = vmatpush2.bf16.xpose.msra.mxu0 0
        %1020 = vmatprep.subr.bf16.mxu0 0
        %1021 = vmatpush2.bf16.xpose.msra.mxu0 0
        %1022 = vmatprep.subr.bf16.mxu0 0
        %1023 = vmatpush2.bf16.xpose.msra.mxu0 0
        %1024 = vmatprep.mubr.bf16.mxu0 0
        %1025 = vmatmul.mubr.bf16.gmra.mxu0 %v987
        %v1026 = vpop.f32.mrf.mxu0
        %v1027 = vadd.f32 0.0, %v1026
        %v1028 = vpop.f32.mrf.mxu0
        %v1029 = vpop.f32.mrf.mxu0
        %v1030 = vpop.f32.mrf.mxu0
        %1031 = vdwg.mxu0
        %v1032 = vsel %vm921, %v1027, -inf
        %1033 = vmax.xlane.f32.xlu0 %v1032
        %v1034 = vpop.xlane.xlu0 %1033
        %v1035 = vsub.f32 %v1027, %v1034
        %v1036 = vmul.f32 %v1035, 1.442695
        %v1037 = vpow.pop %v1036
        %v1038 = vsel %vm921, %v1037, 0.0
        %1039 = vadd.xlane.f32.xlu0 %v1038
        %v1040 = vpop.xlane.xlu0 %1039
        %v1041 = vrcp.pop %v1040
        %v1042 = vmul.f32 %v1037, %v1041
        %v1043 = vpack.c.bf16 %v1042, %v1042
        %1045 = vrot.lane.b32.xlu0 %v871, 64
        %v1046 = vpop.permute.xlu0 %1045
        %v1048 = vsel %vm934, %v1043, 0
        %v1051 = vsel %vm938, %v1046, 0
        %1053 = vmatprep.subr.bf16.mxu0 0
        %1054 = vmatpush1.bf16.msra.mxu0 0
        %1055 = vmatprep.subr.bf16.mxu0 0
        %1056 = vmatpush1.bf16.msra.mxu0 0
        %1057 = vmatprep.subr.bf16.mxu0 0
        %1058 = vmatpush1.bf16.msra.mxu0 0
        %1059 = vmatprep.subr.bf16.mxu0 0
        %1060 = vmatpush1.bf16.msra.mxu0 0
        %1061 = vmatprep.subr.bf16.mxu0 0
        %1062 = vmatpush1.bf16.msra.mxu0 0
        %1063 = vmatprep.subr.bf16.mxu0 0
        %1064 = vmatpush1.bf16.msra.mxu0 0
        %1065 = vmatprep.subr.bf16.mxu0 0
        %1066 = vmatpush1.bf16.msra.mxu0 0
        %1067 = vmatprep.subr.bf16.mxu0 0
        %1068 = vmatpush1.bf16.msra.mxu0 %v1051
        %1069 = vmatprep.subr.bf16.mxu0 0
        %1070 = vmatpush2.bf16.msra.mxu0 0
        %1071 = vmatprep.subr.bf16.mxu0 0
        %1072 = vmatpush2.bf16.msra.mxu0 0
        %1073 = vmatprep.subr.bf16.mxu0 0
        %1074 = vmatpush2.bf16.msra.mxu0 0
        %1075 = vmatprep.subr.bf16.mxu0 0
        %1076 = vmatpush2.bf16.msra.mxu0 0
        %1077 = vmatprep.subr.bf16.mxu0 0
        %1078 = vmatpush2.bf16.msra.mxu0 0
        %1079 = vmatprep.subr.bf16.mxu0 0
        %1080 = vmatpush2.bf16.msra.mxu0 0
        %1081 = vmatprep.subr.bf16.mxu0 0
        %1082 = vmatpush2.bf16.msra.mxu0 0
        %1083 = vmatprep.subr.bf16.mxu0 0
        %1084 = vmatpush2.bf16.msra.mxu0 0
        %1085 = vmatprep.mubr.bf16.mxu0 0
        %1086 = vmatmul.mubr.bf16.gmra.mxu0 %v1048
        %v1087 = vpop.f32.mrf.mxu0
        %v1088 = vadd.f32 0.0, %v1087
        %v1089 = vpop.f32.mrf.mxu0
        %v1090 = vpop.f32.mrf.mxu0
        %v1091 = vpop.f32.mrf.mxu0
        %1092 = vdwg.mxu0
        %v1093 = vpack.c.bf16 %v742, %v742
        %v1094 = vpack.c.bf16 %v863, %v863
        %1096 = vrot.lane.b32.xlu0 %v982, 64
        %v1097 = vpop.permute.xlu0 %1096
        %v1099 = vsel %vm701, %v1093, 0
        %v1102 = vsel %vm701, %v1097, 0
        %1104 = vmatprep.subr.bf16.mxu0 0
        %1105 = vmatpush1.bf16.xpose.msra.mxu0 0
        %1106 = vmatprep.subr.bf16.mxu0 0
        %1107 = vmatpush1.bf16.xpose.msra.mxu0 0
        %1108 = vmatprep.subr.bf16.mxu0 0
        %1109 = vmatpush1.bf16.xpose.msra.mxu0 0
        %1110 = vmatprep.subr.bf16.mxu0 0
        %1111 = vmatpush1.bf16.xpose.msra.mxu0 0
        %1112 = vmatprep.subr.bf16.mxu0 0
        %1113 = vmatpush1.bf16.xpose.msra.mxu0 0
        %1114 = vmatprep.subr.bf16.mxu0 0
        %1115 = vmatpush1.bf16.xpose.msra.mxu0 0
        %1116 = vmatprep.subr.bf16.mxu0 0
        %1117 = vmatpush1.bf16.xpose.msra.mxu0 0
        %1118 = vmatprep.subr.bf16.mxu0 0
        %1119 = vmatpush1.bf16.xpose.msra.mxu0 %v1102
        %1120 = vmatprep.subr.bf16.mxu0 0
        %1121 = vmatpush2.bf16.xpose.msra.mxu0 0
        %1122 = vmatprep.subr.bf16.mxu0 0
        %1123 = vmatpush2.bf16.xpose.msra.mxu0 0
        %1124 = vmatprep.subr.bf16.mxu0 0
        %1125 = vmatpush2.bf16.xpose.msra.mxu0 0
        %1126 = vmatprep.subr.bf16.mxu0 0
        %1127 = vmatpush2.bf16.xpose.msra.mxu0 0
        %1128 = vmatprep.subr.bf16.mxu0 0
        %1129 = vmatpush2.bf16.xpose.msra.mxu0 0
        %1130 = vmatprep.subr.bf16.mxu0 0
        %1131 = vmatpush2.bf16.xpose.msra.mxu0 0
        %1132 = vmatprep.subr.bf16.mxu0 0
        %1133 = vmatpush2.bf16.xpose.msra.mxu0 0
        %1134 = vmatprep.subr.bf16.mxu0 0
        %1135 = vmatpush2.bf16.xpose.msra.mxu0 0
        %1136 = vmatprep.mubr.bf16.mxu0 0
        %1137 = vmatmul.mubr.bf16.gmra.mxu0 %v1099
        %v1138 = vpop.f32.mrf.mxu0
        %v1139 = vadd.f32 0.0, %v1138
        %v1140 = vpop.f32.mrf.mxu0
        %v1141 = vpop.f32.mrf.mxu0
        %v1142 = vpop.f32.mrf.mxu0
        %1143 = vdwg.mxu0
        %v1144 = vsel %vm921, %v1139, -inf
        %1145 = vmax.xlane.f32.xlu0 %v1144
        %v1146 = vpop.xlane.xlu0 %1145
        %v1147 = vsub.f32 %v1139, %v1146
        %v1148 = vmul.f32 %v1147, 1.442695
        %v1149 = vpow.pop %v1148
        %v1150 = vsel %vm921, %v1149, 0.0
        %1151 = vadd.xlane.f32.xlu0 %v1150
        %v1152 = vpop.xlane.xlu0 %1151
        %v1153 = vrcp.pop %v1152
        %v1154 = vmul.f32 %v1149, %v1153
        %v1155 = vpack.c.bf16 %v1154, %v1154
        %v1157 = vsel %vm934, %v1155, 0
        %v1160 = vsel %vm938, %v1094, 0
        %1162 = vmatprep.subr.bf16.mxu0 0
        %1163 = vmatpush1.bf16.msra.mxu0 0
        %1164 = vmatprep.subr.bf16.mxu0 0
        %1165 = vmatpush1.bf16.msra.mxu0 0
        %1166 = vmatprep.subr.bf16.mxu0 0
        %1167 = vmatpush1.bf16.msra.mxu0 0
        %1168 = vmatprep.subr.bf16.mxu0 0
        %1169 = vmatpush1.bf16.msra.mxu0 0
        %1170 = vmatprep.subr.bf16.mxu0 0
        %1171 = vmatpush1.bf16.msra.mxu0 0
        %1172 = vmatprep.subr.bf16.mxu0 0
        %1173 = vmatpush1.bf16.msra.mxu0 0
        %1174 = vmatprep.subr.bf16.mxu0 0
        %1175 = vmatpush1.bf16.msra.mxu0 0
        %1176 = vmatprep.subr.bf16.mxu0 0
        %1177 = vmatpush1.bf16.msra.mxu0 %v1160
        %1178 = vmatprep.subr.bf16.mxu0 0
        %1179 = vmatpush2.bf16.msra.mxu0 0
        %1180 = vmatprep.subr.bf16.mxu0 0
        %1181 = vmatpush2.bf16.msra.mxu0 0
        %1182 = vmatprep.subr.bf16.mxu0 0
        %1183 = vmatpush2.bf16.msra.mxu0 0
        %1184 = vmatprep.subr.bf16.mxu0 0
        %1185 = vmatpush2.bf16.msra.mxu0 0
        %1186 = vmatprep.subr.bf16.mxu0 0
        %1187 = vmatpush2.bf16.msra.mxu0 0
        %1188 = vmatprep.subr.bf16.mxu0 0
        %1189 = vmatpush2.bf16.msra.mxu0 0
        %1190 = vmatprep.subr.bf16.mxu0 0
        %1191 = vmatpush2.bf16.msra.mxu0 0
        %1192 = vmatprep.subr.bf16.mxu0 0
        %1193 = vmatpush2.bf16.msra.mxu0 0
        %1194 = vmatprep.mubr.bf16.mxu0 0
        %1195 = vmatmul.mubr.bf16.gmra.mxu0 %v1157
        %v1196 = vpop.f32.mrf.mxu0
        %v1197 = vadd.f32 0.0, %v1196
        %v1198 = vpop.f32.mrf.mxu0
        %v1199 = vpop.f32.mrf.mxu0
        %v1200 = vpop.f32.mrf.mxu0
        %1201 = vdwg.mxu0
        %v1202 = vpack.c.bf16 %v822, %v822
        %1204 = vrot.lane.b32.xlu0 %v1093, 64
        %v1205 = vpop.permute.xlu0 %1204
        %v1207 = vsel %vm701, %v1205, 0
        %v1210 = vsel %vm701, %v1202, 0
        %1212 = vmatprep.subr.bf16.mxu0 0
        %1213 = vmatpush1.bf16.xpose.msra.mxu0 0
        %1214 = vmatprep.subr.bf16.mxu0 0
        %1215 = vmatpush1.bf16.xpose.msra.mxu0 0
        %1216 = vmatprep.subr.bf16.mxu0 0
        %1217 = vmatpush1.bf16.xpose.msra.mxu0 0
        %1218 = vmatprep.subr.bf16.mxu0 0
        %1219 = vmatpush1.bf16.xpose.msra.mxu0 0
        %1220 = vmatprep.subr.bf16.mxu0 0
        %1221 = vmatpush1.bf16.xpose.msra.mxu0 0
        %1222 = vmatprep.subr.bf16.mxu0 0
        %1223 = vmatpush1.bf16.xpose.msra.mxu0 0
        %1224 = vmatprep.subr.bf16.mxu0 0
        %1225 = vmatpush1.bf16.xpose.msra.mxu0 0
        %1226 = vmatprep.subr.bf16.mxu0 0
        %1227 = vmatpush1.bf16.xpose.msra.mxu0 %v1210
        %1228 = vmatprep.subr.bf16.mxu0 0
        %1229 = vmatpush2.bf16.xpose.msra.mxu0 0
        %1230 = vmatprep.subr.bf16.mxu0 0
        %1231 = vmatpush2.bf16.xpose.msra.mxu0 0
        %1232 = vmatprep.subr.bf16.mxu0 0
        %1233 = vmatpush2.bf16.xpose.msra.mxu0 0
        %1234 = vmatprep.subr.bf16.mxu0 0
        %1235 = vmatpush2.bf16.xpose.msra.mxu0 0
        %1236 = vmatprep.subr.bf16.mxu0 0
        %1237 = vmatpush2.bf16.xpose.msra.mxu0 0
        %1238 = vmatprep.subr.bf16.mxu0 0
        %1239 = vmatpush2.bf16.xpose.msra.mxu0 0
        %1240 = vmatprep.subr.bf16.mxu0 0
        %1241 = vmatpush2.bf16.xpose.msra.mxu0 0
        %1242 = vmatprep.subr.bf16.mxu0 0
        %1243 = vmatpush2.bf16.xpose.msra.mxu0 0
        %1244 = vmatprep.mubr.bf16.mxu0 0
        %1245 = vmatmul.mubr.bf16.gmra.mxu0 %v1207
        %v1246 = vpop.f32.mrf.mxu0
        %v1247 = vadd.f32 0.0, %v1246
        %v1248 = vpop.f32.mrf.mxu0
        %v1249 = vpop.f32.mrf.mxu0
        %v1250 = vpop.f32.mrf.mxu0
        %1251 = vdwg.mxu0
        %v1252 = vsel %vm921, %v1247, -inf
        %1253 = vmax.xlane.f32.xlu0 %v1252
        %v1254 = vpop.xlane.xlu0 %1253
        %v1255 = vsub.f32 %v1247, %v1254
        %v1256 = vmul.f32 %v1255, 1.442695
        %v1257 = vpow.pop %v1256
        %v1258 = vsel %vm921, %v1257, 0.0
        %1259 = vadd.xlane.f32.xlu0 %v1258
        %v1260 = vpop.xlane.xlu0 %1259
        %v1261 = vrcp.pop %v1260
        %v1262 = vmul.f32 %v1257, %v1261
        %v1263 = vpack.c.bf16 %v1262, %v1262
        %1265 = vrot.lane.b32.xlu0 %v1094, 64
        %v1266 = vpop.permute.xlu0 %1265
        %v1268 = vsel %vm934, %v1263, 0
        %v1271 = vsel %vm938, %v1266, 0
        %1273 = vmatprep.subr.bf16.mxu0 0
        %1274 = vmatpush1.bf16.msra.mxu0 0
        %1275 = vmatprep.subr.bf16.mxu0 0
        %1276 = vmatpush1.bf16.msra.mxu0 0
        %1277 = vmatprep.subr.bf16.mxu0 0
        %1278 = vmatpush1.bf16.msra.mxu0 0
        %1279 = vmatprep.subr.bf16.mxu0 0
        %1280 = vmatpush1.bf16.msra.mxu0 0
        %1281 = vmatprep.subr.bf16.mxu0 0
        %1282 = vmatpush1.bf16.msra.mxu0 0
        %1283 = vmatprep.subr.bf16.mxu0 0
        %1284 = vmatpush1.bf16.msra.mxu0 0
        %1285 = vmatprep.subr.bf16.mxu0 0
        %1286 = vmatpush1.bf16.msra.mxu0 0
        %1287 = vmatprep.subr.bf16.mxu0 0
        %1288 = vmatpush1.bf16.msra.mxu0 %v1271
        %1289 = vmatprep.subr.bf16.mxu0 0
        %1290 = vmatpush2.bf16.msra.mxu0 0
        %1291 = vmatprep.subr.bf16.mxu0 0
        %1292 = vmatpush2.bf16.msra.mxu0 0
        %1293 = vmatprep.subr.bf16.mxu0 0
        %1294 = vmatpush2.bf16.msra.mxu0 0
        %1295 = vmatprep.subr.bf16.mxu0 0
        %1296 = vmatpush2.bf16.msra.mxu0 0
        %1297 = vmatprep.subr.bf16.mxu0 0
        %1298 = vmatpush2.bf16.msra.mxu0 0
        %1299 = vmatprep.subr.bf16.mxu0 0
        %1300 = vmatpush2.bf16.msra.mxu0 0
        %1301 = vmatprep.subr.bf16.mxu0 0
        %1302 = vmatpush2.bf16.msra.mxu0 0
        %1303 = vmatprep.subr.bf16.mxu0 0
        %1304 = vmatpush2.bf16.msra.mxu0 0
        %1305 = vmatprep.mubr.bf16.mxu0 0
        %1306 = vmatmul.mubr.bf16.gmra.mxu0 %v1268
        %v1307 = vpop.f32.mrf.mxu0
        %v1308 = vadd.f32 0.0, %v1307
        %v1309 = vpop.f32.mrf.mxu0
        %v1310 = vpop.f32.mrf.mxu0
        %v1311 = vpop.f32.mrf.mxu0
        %1312 = vdwg.mxu0
        %v1313 = vpack.c.bf16 %v865, %v865
        %1315 = vrot.lane.b32.xlu0 %v1202, 64
        %v1316 = vpop.permute.xlu0 %1315
        %v1318 = vsel %vm701, %v870, 0
        %v1321 = vsel %vm701, %v1316, 0
        %1323 = vmatprep.subr.bf16.mxu0 0
        %1324 = vmatpush1.bf16.xpose.msra.mxu0 0
        %1325 = vmatprep.subr.bf16.mxu0 0
        %1326 = vmatpush1.bf16.xpose.msra.mxu0 0
        %1327 = vmatprep.subr.bf16.mxu0 0
        %1328 = vmatpush1.bf16.xpose.msra.mxu0 0
        %1329 = vmatprep.subr.bf16.mxu0 0
        %1330 = vmatpush1.bf16.xpose.msra.mxu0 0
        %1331 = vmatprep.subr.bf16.mxu0 0
        %1332 = vmatpush1.bf16.xpose.msra.mxu0 0
        %1333 = vmatprep.subr.bf16.mxu0 0
        %1334 = vmatpush1.bf16.xpose.msra.mxu0 0
        %1335 = vmatprep.subr.bf16.mxu0 0
        %1336 = vmatpush1.bf16.xpose.msra.mxu0 0
        %1337 = vmatprep.subr.bf16.mxu0 0
        %1338 = vmatpush1.bf16.xpose.msra.mxu0 %v1321
        %1339 = vmatprep.subr.bf16.mxu0 0
        %1340 = vmatpush2.bf16.xpose.msra.mxu0 0
        %1341 = vmatprep.subr.bf16.mxu0 0
        %1342 = vmatpush2.bf16.xpose.msra.mxu0 0
        %1343 = vmatprep.subr.bf16.mxu0 0
        %1344 = vmatpush2.bf16.xpose.msra.mxu0 0
        %1345 = vmatprep.subr.bf16.mxu0 0
        %1346 = vmatpush2.bf16.xpose.msra.mxu0 0
        %1347 = vmatprep.subr.bf16.mxu0 0
        %1348 = vmatpush2.bf16.xpose.msra.mxu0 0
        %1349 = vmatprep.subr.bf16.mxu0 0
        %1350 = vmatpush2.bf16.xpose.msra.mxu0 0
        %1351 = vmatprep.subr.bf16.mxu0 0
        %1352 = vmatpush2.bf16.xpose.msra.mxu0 0
        %1353 = vmatprep.subr.bf16.mxu0 0
        %1354 = vmatpush2.bf16.xpose.msra.mxu0 0
        %1355 = vmatprep.mubr.bf16.mxu0 0
        %1356 = vmatmul.mubr.bf16.gmra.mxu0 %v1318
        %v1357 = vpop.f32.mrf.mxu0
        %v1358 = vadd.f32 0.0, %v1357
        %v1359 = vpop.f32.mrf.mxu0
        %v1360 = vpop.f32.mrf.mxu0
        %v1361 = vpop.f32.mrf.mxu0
        %1362 = vdwg.mxu0
        %v1363 = vsel %vm921, %v1358, -inf
        %1364 = vmax.xlane.f32.xlu0 %v1363
        %v1365 = vpop.xlane.xlu0 %1364
        %v1366 = vsub.f32 %v1358, %v1365
        %v1367 = vmul.f32 %v1366, 1.442695
        %v1368 = vpow.pop %v1367
        %v1369 = vsel %vm921, %v1368, 0.0
        %1370 = vadd.xlane.f32.xlu0 %v1369
        %v1371 = vpop.xlane.xlu0 %1370
        %v1372 = vrcp.pop %v1371
        %v1373 = vmul.f32 %v1368, %v1372
        %v1374 = vpack.c.bf16 %v1373, %v1373
        %v1376 = vsel %vm934, %v1374, 0
        %v1379 = vsel %vm938, %v1313, 0
        %1381 = vmatprep.subr.bf16.mxu0 0
        %1382 = vmatpush1.bf16.msra.mxu0 0
        %1383 = vmatprep.subr.bf16.mxu0 0
        %1384 = vmatpush1.bf16.msra.mxu0 0
        %1385 = vmatprep.subr.bf16.mxu0 0
        %1386 = vmatpush1.bf16.msra.mxu0 0
        %1387 = vmatprep.subr.bf16.mxu0 0
        %1388 = vmatpush1.bf16.msra.mxu0 0
        %1389 = vmatprep.subr.bf16.mxu0 0
        %1390 = vmatpush1.bf16.msra.mxu0 0
        %1391 = vmatprep.subr.bf16.mxu0 0
        %1392 = vmatpush1.bf16.msra.mxu0 0
        %1393 = vmatprep.subr.bf16.mxu0 0
        %1394 = vmatpush1.bf16.msra.mxu0 0
        %1395 = vmatprep.subr.bf16.mxu0 0
        %1396 = vmatpush1.bf16.msra.mxu0 %v1379
        %1397 = vmatprep.subr.bf16.mxu0 0
        %1398 = vmatpush2.bf16.msra.mxu0 0
        %1399 = vmatprep.subr.bf16.mxu0 0
        %1400 = vmatpush2.bf16.msra.mxu0 0
        %1401 = vmatprep.subr.bf16.mxu0 0
        %1402 = vmatpush2.bf16.msra.mxu0 0
        %1403 = vmatprep.subr.bf16.mxu0 0
        %1404 = vmatpush2.bf16.msra.mxu0 0
        %1405 = vmatprep.subr.bf16.mxu0 0
        %1406 = vmatpush2.bf16.msra.mxu0 0
        %1407 = vmatprep.subr.bf16.mxu0 0
        %1408 = vmatpush2.bf16.msra.mxu0 0
        %1409 = vmatprep.subr.bf16.mxu0 0
        %1410 = vmatpush2.bf16.msra.mxu0 0
        %1411 = vmatprep.subr.bf16.mxu0 0
        %1412 = vmatpush2.bf16.msra.mxu0 0
        %1413 = vmatprep.mubr.bf16.mxu0 0
        %1414 = vmatmul.mubr.bf16.gmra.mxu0 %v1376
        %v1415 = vpop.f32.mrf.mxu0
        %v1416 = vadd.f32 0.0, %v1415
        %v1417 = vpop.f32.mrf.mxu0
        %v1418 = vpop.f32.mrf.mxu0
        %v1419 = vpop.f32.mrf.mxu0
        %1420 = vdwg.mxu0
        %1422 = vrot.lane.b32.xlu0 %v1088, 64
        %v1423 = vpop.permute.xlu0 %1422
        %1426 = vrot.lane.b32.xlu0 %v1308, 64
        %v1427 = vpop.permute.xlu0 %1426
        %v1429 = vsel %vm701, %v977, %v1423
        %v1430 = vsel %vm701, %v1197, %v1427
        %v1431 = vpack.c.bf16 %v1429, %v1429
        %v1432 = vpack.c.bf16 %v1430, %v1430
        %v1433 = vpack.c.bf16 %v1416, %v1416
        %v1434 = vld [vmem:[%s7] sm:$0xf]
        %v1435 = vld [vmem:[%s7 + $0x4] sm:$0xf]
        %v1436 = vld [vmem:[%s7 + $0x8] sm:$0xf]
        %v1437 = vld [vmem:[%s7 + $0xc] sm:$0xf]
        %v1438 = vld [vmem:[%s7 + $0x10] sm:$0xf]
        %v1439 = vld [vmem:[%s7 + $0x14] sm:$0xf]
        %v1440 = vld [vmem:[%s7 + $0x18] sm:$0xf]
        %v1441 = vld [vmem:[%s7 + $0x1c] sm:$0xf]
        %v1442 = vld [vmem:[%s7 + $0x20] sm:$0xf]
        %v1443 = vld [vmem:[%s7 + $0x24] sm:$0xf]
        %v1444 = vld [vmem:[%s7 + $0x28] sm:$0xf]
        %v1445 = vld [vmem:[%s7 + $0x2c] sm:$0xf]
        %v1446 = vld [vmem:[%s7 + $0x30] sm:$0xf]
        %v1447 = vld [vmem:[%s7 + $0x34] sm:$0xf]
        %v1448 = vld [vmem:[%s7 + $0x38] sm:$0xf]
        %v1449 = vld [vmem:[%s7 + $0x3c] sm:$0xf]
        %v1450 = vld [vmem:[%s7 + $0x40] sm:$0xf]
        %v1451 = vld [vmem:[%s7 + $0x44] sm:$0xf]
        %v1452 = vld [vmem:[%s7 + $0x48] sm:$0xf]
        %v1453 = vld [vmem:[%s7 + $0x4c] sm:$0xf]
        %v1454 = vld [vmem:[%s7 + $0x50] sm:$0xf]
        %v1455 = vld [vmem:[%s7 + $0x54] sm:$0xf]
        %v1456 = vld [vmem:[%s7 + $0x58] sm:$0xf]
        %v1457 = vld [vmem:[%s7 + $0x5c] sm:$0xf]
        %v1458 = vld [vmem:[%s7 + $0x60] sm:$0xf]
        %v1459 = vld [vmem:[%s7 + $0x64] sm:$0xf]
        %v1460 = vld [vmem:[%s7 + $0x68] sm:$0xf]
        %v1461 = vld [vmem:[%s7 + $0x6c] sm:$0xf]
        %v1462 = vld [vmem:[%s7 + $0x70] sm:$0xf]
        %v1463 = vld [vmem:[%s7 + $0x74] sm:$0xf]
        %v1464 = vld [vmem:[%s7 + $0x78] sm:$0xf]
        %v1465 = vld [vmem:[%s7 + $0x7c] sm:$0xf]
        %v1466 = vld [vmem:[%s7 + $0x80] sm:$0xf]
        %v1467 = vld [vmem:[%s7 + $0x84] sm:$0xf]
        %v1468 = vld [vmem:[%s7 + $0x88] sm:$0xf]
        %v1469 = vld [vmem:[%s7 + $0x8c] sm:$0xf]
        %v1470 = vld [vmem:[%s7 + $0x90] sm:$0xf]
        %v1471 = vld [vmem:[%s7 + $0x94] sm:$0xf]
        %v1472 = vld [vmem:[%s7 + $0x98] sm:$0xf]
        %v1473 = vld [vmem:[%s7 + $0x9c] sm:$0xf]
        %v1474 = vld [vmem:[%s8] sm:$0x1]
        %v1476 = vlaneseq
        %v1477 = vshrl.u32 %v1476, 7
        %v1478 = vsub.s32 0, %v1477
        %v1479 = vrot.slane %v1474, %v1478
        %v1521 = vunpack.c.l.b16 %v1434
        %v1522 = vunpack.c.l.b16 %v1435
        %v1523 = vunpack.c.l.b16 %v1436
        %v1524 = vunpack.c.l.b16 %v1437
        %v1525 = vunpack.c.l.b16 %v1438
        %v1526 = vunpack.c.l.b16 %v1439
        %v1527 = vunpack.c.l.b16 %v1440
        %v1528 = vunpack.c.l.b16 %v1441
        %v1529 = vunpack.c.l.b16 %v1442
        %v1530 = vunpack.c.l.b16 %v1443
        %v1531 = vunpack.c.l.b16 %v1444
        %v1532 = vunpack.c.l.b16 %v1445
        %v1533 = vunpack.c.l.b16 %v1446
        %v1534 = vunpack.c.l.b16 %v1447
        %v1535 = vunpack.c.l.b16 %v1448
        %v1536 = vunpack.c.l.b16 %v1449
        %v1537 = vunpack.c.l.b16 %v1450
        %v1538 = vunpack.c.l.b16 %v1451
        %v1539 = vunpack.c.l.b16 %v1452
        %v1540 = vunpack.c.l.b16 %v1453
        %v1541 = vunpack.c.l.b16 %v1454
        %v1542 = vunpack.c.l.b16 %v1455
        %v1543 = vunpack.c.l.b16 %v1456
        %v1544 = vunpack.c.l.b16 %v1457
        %v1545 = vunpack.c.l.b16 %v1458
        %v1546 = vunpack.c.l.b16 %v1459
        %v1547 = vunpack.c.l.b16 %v1460
        %v1548 = vunpack.c.l.b16 %v1461
        %v1549 = vunpack.c.l.b16 %v1462
        %v1550 = vunpack.c.l.b16 %v1463
        %v1551 = vunpack.c.l.b16 %v1464
        %v1552 = vunpack.c.l.b16 %v1465
        %v1553 = vunpack.c.l.b16 %v1466
        %v1554 = vunpack.c.l.b16 %v1467
        %v1555 = vunpack.c.l.b16 %v1468
        %v1556 = vunpack.c.l.b16 %v1469
        %v1557 = vunpack.c.l.b16 %v1470
        %v1558 = vunpack.c.l.b16 %v1471
        %v1559 = vunpack.c.l.b16 %v1472
        %v1560 = vunpack.c.l.b16 %v1473
        %v1561 = vpack.c.b16 %v1522, %v1521
        %v1562 = vpack.c.b16 %v1524, %v1523
        %v1563 = vpack.c.b16 %v1526, %v1525
        %v1564 = vpack.c.b16 %v1528, %v1527
        %v1565 = vpack.c.b16 %v1530, %v1529
        %v1566 = vpack.c.b16 %v1532, %v1531
        %v1567 = vpack.c.b16 %v1534, %v1533
        %v1568 = vpack.c.b16 %v1536, %v1535
        %v1569 = vpack.c.b16 %v1538, %v1537
        %v1570 = vpack.c.b16 %v1540, %v1539
        %v1571 = vpack.c.b16 %v1542, %v1541
        %v1572 = vpack.c.b16 %v1544, %v1543
        %v1573 = vpack.c.b16 %v1546, %v1545
        %v1574 = vpack.c.b16 %v1548, %v1547
        %v1575 = vpack.c.b16 %v1550, %v1549
        %v1576 = vpack.c.b16 %v1552, %v1551
        %v1577 = vpack.c.b16 %v1554, %v1553
        %v1578 = vpack.c.b16 %v1556, %v1555
        %v1579 = vpack.c.b16 %v1558, %v1557
        %v1580 = vpack.c.b16 %v1560, %v1559
        %v1602 = vsel %vm701, %v1433, 0
        %1604 = vmatprep.subr.bf16.mxu0 0
        %1605 = vmatpush1.bf16.msra.mxu0 %v1568
        %1606 = vmatprep.subr.bf16.mxu0 0
        %1607 = vmatpush1.bf16.msra.mxu0 %v1567
        %1608 = vmatprep.subr.bf16.mxu0 0
        %1609 = vmatpush1.bf16.msra.mxu0 %v1566
        %1610 = vmatprep.subr.bf16.mxu0 0
        %1611 = vmatpush1.bf16.msra.mxu0 %v1565
        %1612 = vmatprep.subr.bf16.mxu0 0
        %1613 = vmatpush1.bf16.msra.mxu0 %v1564
        %1614 = vmatprep.subr.bf16.mxu0 0
        %1615 = vmatpush1.bf16.msra.mxu0 %v1563
        %1616 = vmatprep.subr.bf16.mxu0 0
        %1617 = vmatpush1.bf16.msra.mxu0 %v1562
        %1618 = vmatprep.subr.bf16.mxu0 0
        %1619 = vmatpush1.bf16.msra.mxu0 %v1561
        %1620 = vmatprep.subr.bf16.mxu0 0
        %1621 = vmatpush2.bf16.msra.mxu0 %v1576
        %1622 = vmatprep.subr.bf16.mxu0 0
        %1623 = vmatpush2.bf16.msra.mxu0 %v1575
        %1624 = vmatprep.subr.bf16.mxu0 0
        %1625 = vmatpush2.bf16.msra.mxu0 %v1574
        %1626 = vmatprep.subr.bf16.mxu0 0
        %1627 = vmatpush2.bf16.msra.mxu0 %v1573
        %1628 = vmatprep.subr.bf16.mxu0 0
        %1629 = vmatpush2.bf16.msra.mxu0 %v1572
        %1630 = vmatprep.subr.bf16.mxu0 0
        %1631 = vmatpush2.bf16.msra.mxu0 %v1571
        %1632 = vmatprep.subr.bf16.mxu0 0
        %1633 = vmatpush2.bf16.msra.mxu0 %v1570
        %1634 = vmatprep.subr.bf16.mxu0 0
        %1635 = vmatpush2.bf16.msra.mxu0 %v1569
        %1636 = vmatprep.mubr.bf16.mxu0 %v1432
        %1637 = vmatmul.mubr.bf16.gmra.mxu0 %v1431
        %v1638 = vpop.f32.mrf.mxu0
        %v1639 = vadd.f32 %v1479, %v1638
        %v1640 = vpop.f32.mrf.mxu0
        %v1641 = vpop.f32.mrf.mxu0
        %v1642 = vpop.f32.mrf.mxu0
        %1643 = vdwg.mxu0
        %1644 = vmatprep.subr.bf16.mxu0 0
        %1645 = vmatpush1.bf16.msra.mxu0 0
        %1646 = vmatprep.subr.bf16.mxu0 0
        %1647 = vmatpush1.bf16.msra.mxu0 0
        %1648 = vmatprep.subr.bf16.mxu0 0
        %1649 = vmatpush1.bf16.msra.mxu0 0
        %1650 = vmatprep.subr.bf16.mxu0 0
        %1651 = vmatpush1.bf16.msra.mxu0 0
        %1652 = vmatprep.subr.bf16.mxu0 0
        %1653 = vmatpush1.bf16.msra.mxu0 %v1580
        %1654 = vmatprep.subr.bf16.mxu0 0
        %1655 = vmatpush1.bf16.msra.mxu0 %v1579
        %1656 = vmatprep.subr.bf16.mxu0 0
        %1657 = vmatpush1.bf16.msra.mxu0 %v1578
        %1658 = vmatprep.subr.bf16.mxu0 0
        %1659 = vmatpush1.bf16.msra.mxu0 %v1577
        %1660 = vmatprep.subr.bf16.mxu0 0
        %1661 = vmatpush2.bf16.msra.mxu0 0
        %1662 = vmatprep.subr.bf16.mxu0 0
        %1663 = vmatpush2.bf16.msra.mxu0 0
        %1664 = vmatprep.subr.bf16.mxu0 0
        %1665 = vmatpush2.bf16.msra.mxu0 0
        %1666 = vmatprep.subr.bf16.mxu0 0
        %1667 = vmatpush2.bf16.msra.mxu0 0
        %1668 = vmatprep.subr.bf16.mxu0 0
        %1669 = vmatpush2.bf16.msra.mxu0 0
        %1670 = vmatprep.subr.bf16.mxu0 0
        %1671 = vmatpush2.bf16.msra.mxu0 0
        %1672 = vmatprep.subr.bf16.mxu0 0
        %1673 = vmatpush2.bf16.msra.mxu0 0
        %1674 = vmatprep.subr.bf16.mxu0 0
        %1675 = vmatpush2.bf16.msra.mxu0 0
        %1676 = vmatprep.mubr.bf16.mxu0 0
        %1677 = vmatmul.mubr.bf16.gmra.mxu0 %v1602
        %v1678 = vpop.f32.mrf.mxu0
        %v1679 = vadd.f32 %v1639, %v1678
        %v1680 = vpop.f32.mrf.mxu0
        %v1681 = vpop.f32.mrf.mxu0
        %v1682 = vpop.f32.mrf.mxu0
        %1683 = vdwg.mxu0
        %vm1684 = vcmask 519168
        %v1685 = vsel %vm1684, %v1679, 0.0
        %1686 = vadd.xlane.f32.xlu0 %v1685
        %v1687 = vpop.xlane.xlu0 %1686
        %v1688 = vxor.u32 %v1687, 2147483648
        %v1689 = vmul.f32 %v1688, 1.442695
        %v1690 = vpow.pop %v1689
        %v1691 = vadd.f32 %v1690, 1.0
        %v1692 = vrcp.pop %v1691
        %v1693 = vmul.f32 1.0, %v1692
        %v1694 = vmul.f32 %v490, %v1693
        %v1695 = vmul.f32 %v491, %v1693
        %v1698 = vcombine.low %v1694, %v1695
        %1700 = vst [vmem:[%s416] sm:$0xff] %v1698
        %v1701 = vld [vmem:[%s377] sm:$0xff]
        %v1703 = vcombine.high %v1701, %v1701
        %v1705 = vsub.f32 %v1694, %v1701
        %v1706 = vsub.f32 %v1695, %v1703
        %v1707 = vmul.f32 %v1705, %v1705
        %v1708 = vmul.f32 %v1706, %v1706
        %v1709 = vsel %vm492, %v1707, 0.0
        %v1710 = vsel %vm492, %v1708, 0.0
        %v1711 = vadd.f32 %v1709, %v1710
        %1712 = vadd.xlane.f32.xlu0 %v1711
        %v1713 = vpop.xlane.xlu0 %1712
        %v1714 = vrot.slane %v1713, 4
        %v1715 = vadd.f32 %v1713, %v1714
        %v1716 = vrot.slane %v1715, 2
        %v1717 = vadd.f32 %v1715, %v1716
        %v1718 = vrot.slane %v1717, 1
        %v1719 = vadd.f32 %v1717, %v1718
        %s1720 = vtos %v1719
        %v1721 = vstv %s1720
        %vm1722 = vcmask 0
        %1723 = vst.msk [vmem:[%s424] sm:$0x1] %vm1722, %v1721
        %s1724 = sand.u32 %s238, 1
        %s1725 = scalar_lea.sflag [#allocation4], %s1724
        %s1726 = sand.u32 %s238, 1
        %s1727 = smul.addr %s1726, 8
        %s1728 = scalar_lea.vmem [#allocation7], %s1727
        %p1729 = scmp.lt.s32.totalorder %s31, 1
        %s1730 = scalar_select %p1729, %s31, 1
        %s1731 = scalar_lea.vmem %s10, %s1730
        // Predicated region
        $region65: #{tpu_custom_call.1} parent=55 // pred_check
          %p1732 = pneg %p248
        $region66: #{tpu_custom_call.1} parent=55 // pred_check_branch
          %1734 = sbr.rel (%p1732) target = $region68
        $region67: #{tpu_custom_call.1} parent=55 // pred_region
          %s1736 = ssub.s32 128, 128
          %1737 = vsyncadd %s1725, %s1736
          %s1738 = smul.addr %s31, 2
          %s1739 = smul.addr %s1738, 64
          %s1740 = scalar_lea.hbm %s9, %s1739
          %s1742 = sshll.u32 %s1728, 4
          %s1743 = int_to_ptr.vmem [resolvable:$true] %s1742
          %1745 = dma.vmem_to_hbm [thread:$0]  %s1743, 128, %s1740, %s1725
        $region68: #{tpu_custom_call.1} parent=55 // pred_fallthru
          _
        // Predicated region
        $region69: #{tpu_custom_call.1} parent=55 // pred_check
          %p1746 = pneg %p274
        $region70: #{tpu_custom_call.1} parent=55 // pred_check_branch
          %1748 = sbr.rel (%p1746) target = $region72
        $region71: #{tpu_custom_call.1} parent=55 // pred_region
          _
        $region72: #{tpu_custom_call.1} parent=55 // pred_fallthru
          _
      $region56: #{tpu_custom_call.1} parent=5 // pred_fallthru
        _
      %p1749 = scmp.le.s32.totalorder 2, %s26
      // Predicated region
      $region73: #{tpu_custom_call.1} parent=5 // pred_check
        %p1750 = pneg %p1749
      $region74: #{tpu_custom_call.1} parent=5 // pred_check_branch
        %1752 = sbr.rel (%p1750) target = $region76
      $region75: #{tpu_custom_call.1} parent=5 // pred_region
        %s1753 = ssub.s32 %s26, 2
        // Predicated region
        $region77: #{tpu_custom_call.1} parent=75 // pred_check
          %p1754 = pneg %p254
        $region78: #{tpu_custom_call.1} parent=75 // pred_check_branch
          %1756 = sbr.rel (%p1754) target = $region80
        $region79: #{tpu_custom_call.1} parent=75 // pred_region
          %s1757 = sand.u32 %s239, 1
          %s1758 = scalar_lea.sflag [#allocation4], %s1757
          %s1759 = sand.u32 %s239, 1
          %s1760 = smul.addr %s1759, 8
          %s1761 = scalar_lea.vmem [#allocation7], %s1760
          %1762 = dma.done %s1758, 128
        $region80: #{tpu_custom_call.1} parent=75 // pred_fallthru
          _
        // Predicated region
        $region81: #{tpu_custom_call.1} parent=75 // pred_check
          %p1763 = pneg %p280
        $region82: #{tpu_custom_call.1} parent=75 // pred_check_branch
          %1765 = sbr.rel (%p1763) target = $region84
        $region83: #{tpu_custom_call.1} parent=75 // pred_region
          %p1766 = scmp.lt.s32.totalorder %s32, 1
          %s1767 = scalar_select %p1766, %s32, 1
          %s1768 = scalar_lea.vmem %s10, %s1767
        $region84: #{tpu_custom_call.1} parent=75 // pred_fallthru
          _
      $region76: #{tpu_custom_call.1} parent=5 // pred_fallthru
        _
    $region6: #{tpu_custom_call.1} parent=1 // loop_footer
      %s30 = sadd.s32 1, %s26
    $region7: #{tpu_custom_call.1} parent=1 // loop_footer_branch
      %25 = sbr.rel target = $region3
    $region8: #{tpu_custom_call.1} parent=1 // loop_exit
      _
    %1769 = vsyncpa [#allocation3], 1
    %s1770 = scalar_lea.sflag [#allocation3], 1
    %1771 = vsyncpa %s1770, 1
    %1772 = vsyncpa [#allocation6], 1
    %s1773 = scalar_lea.sflag [#allocation6], 1
    %1774 = vsyncpa %s1773, 1
    %1775 = vsyncpa [#allocation4], 1
    %s1776 = scalar_lea.sflag [#allocation4], 1
    %1777 = vsyncpa %s1776, 1

</llo_original>
